<compile_context>
chip_gen: v7x
topology: tpu7x:2x2x1
jax: 0.10.0
libtpu: 0.0.40
codegen_flags: <defaults>
</compile_context>

<pallas_src>
import functools
import math

import jax
import jax.numpy as jnp
import numpy as np
from jax import lax
from jax.experimental import pallas as pl
from jax.experimental.pallas import tpu as pltpu

HEADS = 4
HIDDEN = 8
HD = HEADS * HIDDEN          # 32: per-conv output width == padded feature width
DEPTH = 5                    # HLA64: 2^5 = 32 leaf GATBlocks
N_LEAVES = 1 << DEPTH        # 32 GATBlocks
N_CONVS = 2 * N_LEAVES       # 64 GAT convs
N_HLA_LINS = N_LEAVES - 1    # 31 HLA-level Linears (root is consumed last)


# ----------------------------------------------------------------------------
# Fused kernel: the entire HLA64 tree in one pallas_call
# ----------------------------------------------------------------------------
def _hla64_kernel(x_ref, negm_ref, hmstack_ref, wext_ref, asrcw_ref, bc_ref,
                  wblk_ref, bblk_ref, whla_ref, bhla_ref, o_ref,
                  pend_ref, cur_ref, y_ref, *, heads, depth, n):
    n_leaves = 1 << depth
    f32 = jnp.float32
    hd = HD

    # Hoisted once for all 64 convs (loop-invariant):
    negm = negm_ref[...]          # (H*n, n)  additive -1e30 non-edge mask, head-stacked
    hmstack = hmstack_ref[...]    # (H*n, hd) 0/1 head-column mask, head-stacked

    cur_ref[...] = x_ref[...]                       # running input of the next GATBlock
    pend_ref[...] = jnp.zeros_like(pend_ref)        # pending left-subtree results

    def gat_conv(x, c):
        """One multi-head GAT conv; c is a (dynamic) index into the stacked params."""
        wext = wext_ref[c]          # (hd, hd+H): [:, :hd] = W, [:, hd:] = W @ a_dst (per head)
        asw = asrcw_ref[c]          # (H, hd):    row h = (W @ a_src_h)^T

        # Feature transform + dst attention scores from one matmul; src scores
        # straight from x (no dependency on h), so both matmuls issue back-to-back.
        z = jnp.dot(x, wext, preferred_element_type=f32)              # (n, hd+H)
        h = z[:, :hd]                                                  # (n, hd)
        dst = z[:, hd:]                                                # (n, H)
        src_t = lax.dot_general(asw, x, (((1,), (1,)), ((), ())),
                                preferred_element_type=f32)            # (H, n)

        # Head-stacked score slab (H*n, n): row h*n+i = head h, destination node i.
        e = jnp.concatenate(
            [dst[:, hh:hh + 1] + src_t[hh:hh + 1, :] for hh in range(heads)],
            axis=0)                                                    # (H*n, n)
        e = jnp.where(e > 0, e, 0.2 * e) + negm                        # LeakyReLU(0.2) + mask
        e = e - jnp.max(e, axis=1, keepdims=True)                      # stable softmax shift
        p = jnp.exp(e)                                                 # masked entries -> 0
        denom = jnp.sum(p, axis=1, keepdims=True)                      # (H*n, 1)
        attn = p * pl.reciprocal(denom)                                # exact reciprocal

        # ONE aggregation matmul for all heads, then recombine with the hoisted mask.
        agg = jnp.dot(attn, h, preferred_element_type=f32) * hmstack   # (H*n, hd)
        out = bc_ref[c]                                                # (1, hd)
        for hh in range(heads):
            out = out + agg[hh * n:(hh + 1) * n, :]                    # (n, hd)
        # activation=True -> ELU
        return jnp.where(out > 0, out, jnp.exp(jnp.minimum(out, 0.0)) - 1.0)

    def leaf(k, lin_base):
        # ---- GATBlock: conv1 -> conv2 -> sum -> Linear ------------------------
        x = cur_ref[...]
        h1 = gat_conv(x, 2 * k)
        h2 = gat_conv(h1, 2 * k + 1)
        y_ref[...] = (jnp.dot(h1 + h2, wblk_ref[k], preferred_element_type=f32)
                      + bblk_ref[k])

        # ---- bubble up the binary tree (predicated: only live combines run).
        # Combine at level d iff bits 0..d-1 of k are all 1; lin_base = number of
        # HLA Linears consumed so far (post-order node completion).
        t = jnp.int32(0)
        for d in range(1, depth + 1):
            m = (1 << d) - 1
            flag = (k & m) == m
            lin_idx = lin_base + (d - 1)

            @pl.when(flag)
            def _(d=d, lin_idx=lin_idx):
                x2 = jnp.maximum(y_ref[...], 0.0)                      # F.relu(block2 out)
                y_ref[...] = (jnp.dot(pend_ref[d - 1] + x2, whla_ref[lin_idx],
                                      preferred_element_type=f32)
                              + bhla_ref[lin_idx])

            t = t + flag.astype(jnp.int32)

        y = y_ref[...]
        x1 = jnp.maximum(y, 0.0)                                        # F.relu(block1 out)
        pend_ref[t] = x1            # pending left operand of the level-(t+1) parent
        cur_ref[...] = x1           # input of the next leaf (first leaf of right sibling)

        @pl.when(k == n_leaves - 1)
        def _():
            o_ref[...] = y                                              # root output only

        return lin_base + t

    lax.fori_loop(0, n_leaves, leaf, jnp.int32(0))


# ----------------------------------------------------------------------------
# Wrapper: one pallas_call, all parameters resident in VMEM (~0.9 MiB total)
# ----------------------------------------------------------------------------
def hla64_forward(params, x, adj):
    n, in_dim = x.shape
    assert in_dim <= HD
    xp = jnp.zeros((n, HD), jnp.float32).at[:, :in_dim].set(x)

    # Hoisted host-side constants (head-stacked layouts used inside the kernel).
    neg_mask = jnp.where(adj > 0, jnp.float32(0.0), jnp.float32(-1e30))   # (n, n)
    neg_mask_stack = jnp.tile(neg_mask, (HEADS, 1))                       # (H*n, n)
    hmask_stack = jnp.repeat(params["hmask4"], n, axis=0)                 # (H*n, HD)

    kern = functools.partial(_hla64_kernel, heads=HEADS, depth=DEPTH, n=n)
    out = pl.pallas_call(
        kern,
        out_shape=jax.ShapeDtypeStruct((n, HD), jnp.float32),
        grid=(1,),
        in_specs=[
            pl.BlockSpec((n, HD), lambda i: (0, 0)),                       # x (padded)
            pl.BlockSpec((HEADS * n, n), lambda i: (0, 0)),                # -inf mask, stacked
            pl.BlockSpec((HEADS * n, HD), lambda i: (0, 0)),               # head col mask, stacked
            pl.BlockSpec((N_CONVS, HD, HD + HEADS), lambda i: (0, 0, 0)),  # [W | W@a_dst] stacked
            pl.BlockSpec((N_CONVS, HEADS, HD), lambda i: (0, 0, 0)),       # a_src @ W^T stacked
            pl.BlockSpec((N_CONVS, 1, HD), lambda i: (0, 0, 0)),           # conv bias
            pl.BlockSpec((N_LEAVES, HD, HD), lambda i: (0, 0, 0)),         # GATBlock Linears
            pl.BlockSpec((N_LEAVES, 1, HD), lambda i: (0, 0, 0)),
            pl.BlockSpec((N_HLA_LINS, HD, HD), lambda i: (0, 0, 0)),       # HLA Linears
            pl.BlockSpec((N_HLA_LINS, 1, HD), lambda i: (0, 0, 0)),
        ],
        out_specs=pl.BlockSpec((n, HD), lambda i: (0, 0)),
        scratch_shapes=[
            pltpu.VMEM((DEPTH + 1, n, HD), jnp.float32),   # pending left-subtree results
            pltpu.VMEM((n, HD), jnp.float32),              # current GATBlock input
            pltpu.VMEM((n, HD), jnp.float32),              # working block output (combine chain)
        ],
        compiler_params=pltpu.CompilerParams(dimension_semantics=("arbitrary",)),
    )(xp, neg_mask_stack, hmask_stack, params["Wext"], params["AsrcW"], params["bc"],
      params["Wblk"], params["bblk"], params["Whla"], params["bhla"])
    return out[:, :params["out_dim"]]


# ----------------------------------------------------------------------------
# Deterministic parameter construction (glorot weights, zero biases), stacked,
# zero-padded to the common 32-wide feature layout, with the attention vectors
# pre-folded into the conv weights (Wext / AsrcW) for the fused kernel.
# ----------------------------------------------------------------------------
def _glorot(rng, fan_in, fan_out):
    lim = math.sqrt(6.0 / (fan_in + fan_out))
    return rng.uniform(-lim, lim, size=(fan_in, fan_out)).astype(np.float32)


def init_hla64_params(in_dim, hidden, out_dim, heads, seed=1234):
    rng = np.random.default_rng(seed)
    hd = heads * hidden
    a_lim = math.sqrt(6.0 / (hidden + 1))

    Wext = np.zeros((N_CONVS, hd, hd + heads), np.float32)
    AsrcW = np.zeros((N_CONVS, heads, hd), np.float32)
    bc = np.zeros((N_CONVS, 1, hd), np.float32)
    for k in range(N_LEAVES):
        # only the leftmost leaf's conv1 sees the raw input dim; every other conv1
        # sees hidden; every conv2 sees heads*hidden.
        in_dims = (in_dim if k == 0 else hidden, hd)
        for j, ind in enumerate(in_dims):
            c = 2 * k + j
            W = np.zeros((hd, hd), np.float32)
            W[:ind, :] = _glorot(rng, ind, hd)
            a_src = rng.uniform(-a_lim, a_lim, size=(heads, hidden)).astype(np.float32)
            a_dst = rng.uniform(-a_lim, a_lim, size=(heads, hidden)).astype(np.float32)
            Asrc_cols = np.zeros((hd, heads), np.float32)
            Adst_cols = np.zeros((hd, heads), np.float32)
            for h in range(heads):
                Asrc_cols[h * hidden:(h + 1) * hidden, h] = a_src[h]
                Adst_cols[h * hidden:(h + 1) * hidden, h] = a_dst[h]
            Wext[c, :, :hd] = W
            Wext[c, :, hd:] = W @ Adst_cols          # dst scores folded into the h matmul
            AsrcW[c] = (W @ Asrc_cols).T             # src scores computed straight from x

    Wblk = np.zeros((N_LEAVES, hd, hd), np.float32)
    bblk = np.zeros((N_LEAVES, 1, hd), np.float32)
    for k in range(N_LEAVES):
        Wblk[k, :, :hidden] = _glorot(rng, hd, hidden)

    Whla = np.zeros((N_HLA_LINS, hd, hd), np.float32)
    bhla = np.zeros((N_HLA_LINS, 1, hd), np.float32)
    for i in range(N_HLA_LINS):
        od = out_dim if i == N_HLA_LINS - 1 else hidden   # root Linear is consumed last
        Whla[i, :hidden, :od] = _glorot(rng, hidden, od)

    hmask4 = np.zeros((heads, hd), np.float32)
    for h in range(heads):
        hmask4[h, h * hidden:(h + 1) * hidden] = 1.0

    params = {k: jnp.asarray(v) for k, v in dict(
        Wext=Wext, AsrcW=AsrcW, bc=bc, Wblk=Wblk, bblk=bblk,
        Whla=Whla, bhla=bhla, hmask4=hmask4).items()}
    params["out_dim"] = out_dim
    return params


def edge_index_to_adj(edge_index, num_nodes):
    src, dst = edge_index[0], edge_index[1]
    adj = jnp.zeros((num_nodes, num_nodes), jnp.float32)
    adj = adj.at[dst, src].set(1.0)          # message src -> dst, aggregate at dst
    # self-loops guarantee every softmax row has at least one unmasked entry
    adj = adj.at[jnp.arange(num_nodes), jnp.arange(num_nodes)].set(1.0)
    return adj


# ----------------------------------------------------------------------------
if __name__ == "__main__":
    N = 16           # graph nodes
    IN_DIM = 16
    OUT_DIM = 8
    E = 48           # directed edges

    key = jax.random.PRNGKey(0)
    kx, ke1, ke2 = jax.random.split(key, 3)

    x = jax.random.normal(kx, (N, IN_DIM), jnp.float32)
    edge_index = jnp.stack([
        jax.random.randint(ke1, (E,), 0, N),
        jax.random.randint(ke2, (E,), 0, N),
    ], axis=0)                                            # (2, E), like PyG

    adj = edge_index_to_adj(edge_index, N)
    params = init_hla64_params(IN_DIM, HIDDEN, OUT_DIM, HEADS)

    fwd = jax.jit(functools.partial(hla64_forward, params))
    out = fwd(x, adj)
    jax.block_until_ready(out)

    assert out.shape == (N, OUT_DIM)
    assert bool(jnp.all(jnp.isfinite(out)))
    print("KERNEL_OK")
</pallas_src>

<mosaic_0001>
module attributes {stable_mosaic.version = 11 : i64} {
  func.func @_hla64_kernel(%arg0: i32, %arg1: memref<16x32xf32, #tpu.memory_space<vmem>>, %arg2: memref<64x16xf32, #tpu.memory_space<vmem>>, %arg3: memref<64x32xf32, #tpu.memory_space<vmem>>, %arg4: memref<64x32x36xf32, #tpu.memory_space<vmem>>, %arg5: memref<64x4x32xf32, #tpu.memory_space<vmem>>, %arg6: memref<64x1x32xf32, #tpu.memory_space<vmem>>, %arg7: memref<32x32x32xf32, #tpu.memory_space<vmem>>, %arg8: memref<32x1x32xf32, #tpu.memory_space<vmem>>, %arg9: memref<31x32x32xf32, #tpu.memory_space<vmem>>, %arg10: memref<31x1x32xf32, #tpu.memory_space<vmem>>, %arg11: memref<16x32xf32, #tpu.memory_space<vmem>>, %arg12: memref<6x16x32xf32, #tpu.memory_space<vmem>>, %arg13: memref<16x32xf32, #tpu.memory_space<vmem>>, %arg14: memref<16x32xf32, #tpu.memory_space<vmem>>) attributes {dimension_semantics = [#tpu.dimension_semantics<arbitrary>], iteration_bounds = array<i64: 1>, scalar_prefetch = 0 : i64, scratch_operands = 3 : i64, tpu.core_type = #tpu.core_type<tc>, window_params = [{pipeline_mode = #tpu.pipeline_mode<synchronous>, transform_indices = @transform_0, window_bounds = array<i64: 16, 32>}, {pipeline_mode = #tpu.pipeline_mode<synchronous>, transform_indices = @transform_1, window_bounds = array<i64: 64, 16>}, {pipeline_mode = #tpu.pipeline_mode<synchronous>, transform_indices = @transform_2, window_bounds = array<i64: 64, 32>}, {pipeline_mode = #tpu.pipeline_mode<synchronous>, transform_indices = @transform_3, window_bounds = array<i64: 64, 32, 36>}, {pipeline_mode = #tpu.pipeline_mode<synchronous>, transform_indices = @transform_4, window_bounds = array<i64: 64, 4, 32>}, {pipeline_mode = #tpu.pipeline_mode<synchronous>, transform_indices = @transform_5, window_bounds = array<i64: 64, 1, 32>}, {pipeline_mode = #tpu.pipeline_mode<synchronous>, transform_indices = @transform_6, window_bounds = array<i64: 32, 32, 32>}, {pipeline_mode = #tpu.pipeline_mode<synchronous>, transform_indices = @transform_7, window_bounds = array<i64: 32, 1, 32>}, {pipeline_mode = #tpu.pipeline_mode<synchronous>, transform_indices = @transform_8, window_bounds = array<i64: 31, 32, 32>}, {pipeline_mode = #tpu.pipeline_mode<synchronous>, transform_indices = @transform_9, window_bounds = array<i64: 31, 1, 32>}, {pipeline_mode = #tpu.pipeline_mode<synchronous>, transform_indices = @transform_10, window_bounds = array<i64: 16, 32>}]} {
    %c0 = arith.constant 0 : index
    %c0_0 = arith.constant 0 : index
    %0 = vector.load %arg2[%c0, %c0_0] : memref<64x16xf32, #tpu.memory_space<vmem>>, vector<64x16xf32>
    %c0_1 = arith.constant 0 : index
    %c0_2 = arith.constant 0 : index
    %1 = vector.load %arg3[%c0_1, %c0_2] : memref<64x32xf32, #tpu.memory_space<vmem>>, vector<64x32xf32>
    %c0_3 = arith.constant 0 : index
    %c0_4 = arith.constant 0 : index
    %2 = vector.load %arg1[%c0_3, %c0_4] : memref<16x32xf32, #tpu.memory_space<vmem>>, vector<16x32xf32>
    %c0_5 = arith.constant 0 : index
    %c0_6 = arith.constant 0 : index
    %3 = vector.load %arg13[%c0_5, %c0_6] : memref<16x32xf32, #tpu.memory_space<vmem>>, vector<16x32xf32>
    tpu.vector_store %arg13[%c0_5, %c0_6], %2 {strides = array<i32>} : memref<16x32xf32, #tpu.memory_space<vmem>>, vector<16x32xf32>,
    %cst = arith.constant 0.000000e+00 : f32
    %4 = vector.broadcast %cst : f32 to vector<6x16x32xf32>
    %c0_7 = arith.constant 0 : index
    %c0_8 = arith.constant 0 : index
    %c0_9 = arith.constant 0 : index
    %5 = vector.load %arg12[%c0_7, %c0_8, %c0_9] : memref<6x16x32xf32, #tpu.memory_space<vmem>>, vector<6x16x32xf32>
    tpu.vector_store %arg12[%c0_7, %c0_8, %c0_9], %4 {strides = array<i32>} : memref<6x16x32xf32, #tpu.memory_space<vmem>>, vector<6x16x32xf32>,
    %c0_i32 = arith.constant 0 : i32
    %c0_i32_10 = arith.constant 0 : i32
    %c32_i32 = arith.constant 32 : i32
    %6 = arith.addi %c0_i32_10, %c32_i32 : i32
    %c1_i32 = arith.constant 1 : i32
    %7 = scf.for %arg15 = %c0_i32_10 to %6 step %c1_i32 iter_args(%arg16 = %c0_i32) -> (i32)  : i32 {
      %c0_12 = arith.constant 0 : index
      %c0_13 = arith.constant 0 : index
      %8 = vector.load %arg13[%c0_12, %c0_13] : memref<16x32xf32, #tpu.memory_space<vmem>>, vector<16x32xf32>
      %c2_i32 = arith.constant 2 : i32
      %9 = arith.muli %c2_i32, %arg15 : i32
      %10 = arith.index_cast %9 : i32 to index
      %c0_14 = arith.constant 0 : index
      %c0_15 = arith.constant 0 : index
      %11 = vector.load %arg4[%10, %c0_14, %c0_15] : memref<64x32x36xf32, #tpu.memory_space<vmem>>, vector<1x32x36xf32>
      %12 = vector.shape_cast %11 : vector<1x32x36xf32> to vector<32x36xf32>
      %13 = arith.index_cast %9 : i32 to index
      %c0_16 = arith.constant 0 : index
      %c0_17 = arith.constant 0 : index
      %14 = vector.load %arg5[%13, %c0_16, %c0_17] : memref<64x4x32xf32, #tpu.memory_space<vmem>>, vector<1x4x32xf32>
      %15 = vector.shape_cast %14 : vector<1x4x32xf32> to vector<4x32xf32>
      %cst_18 = arith.constant dense<0.000000e+00> : vector<16x36xf32>
      %16 = tpu.matmul %8, %12, %cst_18 {dimension_numbers = #tpu.dot_dimension_numbers<[1], [0], [0], [1], [0, 0, 1, 1], [], []>} : vector<16x32xf32>, vector<32x36xf32>, vector<16x36xf32> -> vector<16x36xf32>
      %17 = vector.extract_strided_slice %16 {offsets = [0, 0], sizes = [16, 32], strides = [1, 1]} : vector<16x36xf32> to vector<16x32xf32>
      %18 = vector.extract_strided_slice %16 {offsets = [0, 32], sizes = [16, 4], strides = [1, 1]} : vector<16x36xf32> to vector<16x4xf32>
      %cst_19 = arith.constant dense<0.000000e+00> : vector<4x16xf32>
      %19 = tpu.matmul %15, %8, %cst_19 {dimension_numbers = #tpu.dot_dimension_numbers<[1], [1], [0], [0], [0, 0, 1, 0], [], []>} : vector<4x32xf32>, vector<16x32xf32>, vector<4x16xf32> -> vector<4x16xf32>
      %20 = vector.extract_strided_slice %18 {offsets = [0, 0], sizes = [16, 1], strides = [1, 1]} : vector<16x4xf32> to vector<16x1xf32>
      %21 = vector.extract_strided_slice %19 {offsets = [0, 0], sizes = [1, 16], strides = [1, 1]} : vector<4x16xf32> to vector<1x16xf32>
      %22 = vector.broadcast %20 : vector<16x1xf32> to vector<16x16xf32>
      %23 = vector.broadcast %21 : vector<1x16xf32> to vector<16x16xf32>
      %24 = arith.addf %22, %23 : vector<16x16xf32>
      %25 = vector.extract_strided_slice %18 {offsets = [0, 1], sizes = [16, 1], strides = [1, 1]} : vector<16x4xf32> to vector<16x1xf32>
      %26 = vector.extract_strided_slice %19 {offsets = [1, 0], sizes = [1, 16], strides = [1, 1]} : vector<4x16xf32> to vector<1x16xf32>
      %27 = vector.broadcast %25 : vector<16x1xf32> to vector<16x16xf32>
      %28 = vector.broadcast %26 : vector<1x16xf32> to vector<16x16xf32>
      %29 = arith.addf %27, %28 : vector<16x16xf32>
      %30 = vector.extract_strided_slice %18 {offsets = [0, 2], sizes = [16, 1], strides = [1, 1]} : vector<16x4xf32> to vector<16x1xf32>
      %31 = vector.extract_strided_slice %19 {offsets = [2, 0], sizes = [1, 16], strides = [1, 1]} : vector<4x16xf32> to vector<1x16xf32>
      %32 = vector.broadcast %30 : vector<16x1xf32> to vector<16x16xf32>
      %33 = vector.broadcast %31 : vector<1x16xf32> to vector<16x16xf32>
      %34 = arith.addf %32, %33 : vector<16x16xf32>
      %35 = vector.extract_strided_slice %18 {offsets = [0, 3], sizes = [16, 1], strides = [1, 1]} : vector<16x4xf32> to vector<16x1xf32>
      %36 = vector.extract_strided_slice %19 {offsets = [3, 0], sizes = [1, 16], strides = [1, 1]} : vector<4x16xf32> to vector<1x16xf32>
      %37 = vector.broadcast %35 : vector<16x1xf32> to vector<16x16xf32>
      %38 = vector.broadcast %36 : vector<1x16xf32> to vector<16x16xf32>
      %39 = arith.addf %37, %38 : vector<16x16xf32>
      %40 = tpu.concatenate %24, %29, %34, %39 in 0 : vector<16x16xf32>, vector<16x16xf32>, vector<16x16xf32>, vector<16x16xf32> -> vector<64x16xf32>
      %cst_20 = arith.constant 0.000000e+00 : f32
      %41 = vector.broadcast %cst_20 : f32 to vector<64x16xf32>
      %42 = arith.cmpf ogt, %40, %41 : vector<64x16xf32>
      %cst_21 = arith.constant 2.000000e-01 : f32
      %43 = vector.broadcast %cst_21 : f32 to vector<64x16xf32>
      %44 = arith.mulf %43, %40 : vector<64x16xf32>
      %45 = arith.select %42, %40, %44 : vector<64x16xi1>, vector<64x16xf32>
      %46 = arith.addf %45, %0 : vector<64x16xf32>
      %cst_22 = arith.constant dense<0xFF800000> : vector<64xf32>
      %47 = vector.multi_reduction <maximumf>, %46, %cst_22 [1] : vector<64x16xf32> to vector<64xf32>
      %48 = vector.shape_cast %47 : vector<64xf32> to vector<64x1xf32>
      %49 = vector.broadcast %48 : vector<64x1xf32> to vector<64x16xf32>
      %50 = arith.subf %46, %49 : vector<64x16xf32>
      %51 = math.exp %50 : vector<64x16xf32>
      %cst_23 = arith.constant dense<0.000000e+00> : vector<64xf32>
      %52 = vector.multi_reduction <add>, %51, %cst_23 [1] : vector<64x16xf32> to vector<64xf32>
      %53 = vector.shape_cast %52 : vector<64xf32> to vector<64x1xf32>
      %54 = tpu.reciprocal %53 : vector<64x1xf32> -> vector<64x1xf32>
      %55 = vector.broadcast %54 : vector<64x1xf32> to vector<64x16xf32>
      %56 = arith.mulf %51, %55 : vector<64x16xf32>
      %cst_24 = arith.constant dense<0.000000e+00> : vector<64x32xf32>
      %57 = tpu.matmul %56, %17, %cst_24 {dimension_numbers = #tpu.dot_dimension_numbers<[1], [0], [0], [1], [0, 0, 1, 1], [], []>} : vector<64x16xf32>, vector<16x32xf32>, vector<64x32xf32> -> vector<64x32xf32>
      %58 = arith.mulf %57, %1 : vector<64x32xf32>
      %59 = arith.index_cast %9 : i32 to index
      %c0_25 = arith.constant 0 : index
      %c0_26 = arith.constant 0 : index
      %60 = vector.load %arg6[%59, %c0_25, %c0_26] : memref<64x1x32xf32, #tpu.memory_space<vmem>>, vector<1x1x32xf32>
      %61 = vector.shape_cast %60 : vector<1x1x32xf32> to vector<1x32xf32>
      %62 = vector.extract_strided_slice %58 {offsets = [0, 0], sizes = [16, 32], strides = [1, 1]} : vector<64x32xf32> to vector<16x32xf32>
      %63 = vector.broadcast %61 : vector<1x32xf32> to vector<16x32xf32>
      %64 = arith.addf %63, %62 : vector<16x32xf32>
      %65 = vector.extract_strided_slice %58 {offsets = [16, 0], sizes = [16, 32], strides = [1, 1]} : vector<64x32xf32> to vector<16x32xf32>
      %66 = arith.addf %64, %65 : vector<16x32xf32>
      %67 = vector.extract_strided_slice %58 {offsets = [32, 0], sizes = [16, 32], strides = [1, 1]} : vector<64x32xf32> to vector<16x32xf32>
      %68 = arith.addf %66, %67 : vector<16x32xf32>
      %69 = vector.extract_strided_slice %58 {offsets = [48, 0], sizes = [16, 32], strides = [1, 1]} : vector<64x32xf32> to vector<16x32xf32>
      %70 = arith.addf %68, %69 : vector<16x32xf32>
      %cst_27 = arith.constant 0.000000e+00 : f32
      %71 = vector.broadcast %cst_27 : f32 to vector<16x32xf32>
      %72 = arith.cmpf ogt, %70, %71 : vector<16x32xf32>
      %cst_28 = arith.constant 0.000000e+00 : f32
      %73 = vector.broadcast %cst_28 : f32 to vector<16x32xf32>
      %74 = arith.minimumf %70, %73 : vector<16x32xf32>
      %75 = math.exp %74 : vector<16x32xf32>
      %cst_29 = arith.constant 1.000000e+00 : f32
      %76 = vector.broadcast %cst_29 : f32 to vector<16x32xf32>
      %77 = arith.subf %75, %76 : vector<16x32xf32>
      %78 = arith.select %72, %70, %77 : vector<16x32xi1>, vector<16x32xf32>
      %c2_i32_30 = arith.constant 2 : i32
      %79 = arith.muli %c2_i32_30, %arg15 : i32
      %c1_i32_31 = arith.constant 1 : i32
      %80 = arith.addi %79, %c1_i32_31 : i32
      %81 = arith.index_cast %80 : i32 to index
      %c0_32 = arith.constant 0 : index
      %c0_33 = arith.constant 0 : index
      %82 = vector.load %arg4[%81, %c0_32, %c0_33] : memref<64x32x36xf32, #tpu.memory_space<vmem>>, vector<1x32x36xf32>
      %83 = vector.shape_cast %82 : vector<1x32x36xf32> to vector<32x36xf32>
      %84 = arith.index_cast %80 : i32 to index
      %c0_34 = arith.constant 0 : index
      %c0_35 = arith.constant 0 : index
      %85 = vector.load %arg5[%84, %c0_34, %c0_35] : memref<64x4x32xf32, #tpu.memory_space<vmem>>, vector<1x4x32xf32>
      %86 = vector.shape_cast %85 : vector<1x4x32xf32> to vector<4x32xf32>
      %cst_36 = arith.constant dense<0.000000e+00> : vector<16x36xf32>
      %87 = tpu.matmul %78, %83, %cst_36 {dimension_numbers = #tpu.dot_dimension_numbers<[1], [0], [0], [1], [0, 0, 1, 1], [], []>} : vector<16x32xf32>, vector<32x36xf32>, vector<16x36xf32> -> vector<16x36xf32>
      %88 = vector.extract_strided_slice %87 {offsets = [0, 0], sizes = [16, 32], strides = [1, 1]} : vector<16x36xf32> to vector<16x32xf32>
      %89 = vector.extract_strided_slice %87 {offsets = [0, 32], sizes = [16, 4], strides = [1, 1]} : vector<16x36xf32> to vector<16x4xf32>
      %cst_37 = arith.constant dense<0.000000e+00> : vector<4x16xf32>
      %90 = tpu.matmul %86, %78, %cst_37 {dimension_numbers = #tpu.dot_dimension_numbers<[1], [1], [0], [0], [0, 0, 1, 0], [], []>} : vector<4x32xf32>, vector<16x32xf32>, vector<4x16xf32> -> vector<4x16xf32>
      %91 = vector.extract_strided_slice %89 {offsets = [0, 0], sizes = [16, 1], strides = [1, 1]} : vector<16x4xf32> to vector<16x1xf32>
      %92 = vector.extract_strided_slice %90 {offsets = [0, 0], sizes = [1, 16], strides = [1, 1]} : vector<4x16xf32> to vector<1x16xf32>
      %93 = vector.broadcast %91 : vector<16x1xf32> to vector<16x16xf32>
      %94 = vector.broadcast %92 : vector<1x16xf32> to vector<16x16xf32>
      %95 = arith.addf %93, %94 : vector<16x16xf32>
      %96 = vector.extract_strided_slice %89 {offsets = [0, 1], sizes = [16, 1], strides = [1, 1]} : vector<16x4xf32> to vector<16x1xf32>
      %97 = vector.extract_strided_slice %90 {offsets = [1, 0], sizes = [1, 16], strides = [1, 1]} : vector<4x16xf32> to vector<1x16xf32>
      %98 = vector.broadcast %96 : vector<16x1xf32> to vector<16x16xf32>
      %99 = vector.broadcast %97 : vector<1x16xf32> to vector<16x16xf32>
      %100 = arith.addf %98, %99 : vector<16x16xf32>
      %101 = vector.extract_strided_slice %89 {offsets = [0, 2], sizes = [16, 1], strides = [1, 1]} : vector<16x4xf32> to vector<16x1xf32>
      %102 = vector.extract_strided_slice %90 {offsets = [2, 0], sizes = [1, 16], strides = [1, 1]} : vector<4x16xf32> to vector<1x16xf32>
      %103 = vector.broadcast %101 : vector<16x1xf32> to vector<16x16xf32>
      %104 = vector.broadcast %102 : vector<1x16xf32> to vector<16x16xf32>
      %105 = arith.addf %103, %104 : vector<16x16xf32>
      %106 = vector.extract_strided_slice %89 {offsets = [0, 3], sizes = [16, 1], strides = [1, 1]} : vector<16x4xf32> to vector<16x1xf32>
      %107 = vector.extract_strided_slice %90 {offsets = [3, 0], sizes = [1, 16], strides = [1, 1]} : vector<4x16xf32> to vector<1x16xf32>
      %108 = vector.broadcast %106 : vector<16x1xf32> to vector<16x16xf32>
      %109 = vector.broadcast %107 : vector<1x16xf32> to vector<16x16xf32>
      %110 = arith.addf %108, %109 : vector<16x16xf32>
      %111 = tpu.concatenate %95, %100, %105, %110 in 0 : vector<16x16xf32>, vector<16x16xf32>, vector<16x16xf32>, vector<16x16xf32> -> vector<64x16xf32>
      %cst_38 = arith.constant 0.000000e+00 : f32
      %112 = vector.broadcast %cst_38 : f32 to vector<64x16xf32>
      %113 = arith.cmpf ogt, %111, %112 : vector<64x16xf32>
      %cst_39 = arith.constant 2.000000e-01 : f32
      %114 = vector.broadcast %cst_39 : f32 to vector<64x16xf32>
      %115 = arith.mulf %114, %111 : vector<64x16xf32>
      %116 = arith.select %113, %111, %115 : vector<64x16xi1>, vector<64x16xf32>
      %117 = arith.addf %116, %0 : vector<64x16xf32>
      %cst_40 = arith.constant dense<0xFF800000> : vector<64xf32>
      %118 = vector.multi_reduction <maximumf>, %117, %cst_40 [1] : vector<64x16xf32> to vector<64xf32>
      %119 = vector.shape_cast %118 : vector<64xf32> to vector<64x1xf32>
      %120 = vector.broadcast %119 : vector<64x1xf32> to vector<64x16xf32>
      %121 = arith.subf %117, %120 : vector<64x16xf32>
      %122 = math.exp %121 : vector<64x16xf32>
      %cst_41 = arith.constant dense<0.000000e+00> : vector<64xf32>
      %123 = vector.multi_reduction <add>, %122, %cst_41 [1] : vector<64x16xf32> to vector<64xf32>
      %124 = vector.shape_cast %123 : vector<64xf32> to vector<64x1xf32>
      %125 = tpu.reciprocal %124 : vector<64x1xf32> -> vector<64x1xf32>
      %126 = vector.broadcast %125 : vector<64x1xf32> to vector<64x16xf32>
      %127 = arith.mulf %122, %126 : vector<64x16xf32>
      %cst_42 = arith.constant dense<0.000000e+00> : vector<64x32xf32>
      %128 = tpu.matmul %127, %88, %cst_42 {dimension_numbers = #tpu.dot_dimension_numbers<[1], [0], [0], [1], [0, 0, 1, 1], [], []>} : vector<64x16xf32>, vector<16x32xf32>, vector<64x32xf32> -> vector<64x32xf32>
      %129 = arith.mulf %128, %1 : vector<64x32xf32>
      %130 = arith.index_cast %80 : i32 to index
      %c0_43 = arith.constant 0 : index
      %c0_44 = arith.constant 0 : index
      %131 = vector.load %arg6[%130, %c0_43, %c0_44] : memref<64x1x32xf32, #tpu.memory_space<vmem>>, vector<1x1x32xf32>
      %132 = vector.shape_cast %131 : vector<1x1x32xf32> to vector<1x32xf32>
      %133 = vector.extract_strided_slice %129 {offsets = [0, 0], sizes = [16, 32], strides = [1, 1]} : vector<64x32xf32> to vector<16x32xf32>
      %134 = vector.broadcast %132 : vector<1x32xf32> to vector<16x32xf32>
      %135 = arith.addf %134, %133 : vector<16x32xf32>
      %136 = vector.extract_strided_slice %129 {offsets = [16, 0], sizes = [16, 32], strides = [1, 1]} : vector<64x32xf32> to vector<16x32xf32>
      %137 = arith.addf %135, %136 : vector<16x32xf32>
      %138 = vector.extract_strided_slice %129 {offsets = [32, 0], sizes = [16, 32], strides = [1, 1]} : vector<64x32xf32> to vector<16x32xf32>
      %139 = arith.addf %137, %138 : vector<16x32xf32>
      %140 = vector.extract_strided_slice %129 {offsets = [48, 0], sizes = [16, 32], strides = [1, 1]} : vector<64x32xf32> to vector<16x32xf32>
      %141 = arith.addf %139, %140 : vector<16x32xf32>
      %cst_45 = arith.constant 0.000000e+00 : f32
      %142 = vector.broadcast %cst_45 : f32 to vector<16x32xf32>
      %143 = arith.cmpf ogt, %141, %142 : vector<16x32xf32>
      %cst_46 = arith.constant 0.000000e+00 : f32
      %144 = vector.broadcast %cst_46 : f32 to vector<16x32xf32>
      %145 = arith.minimumf %141, %144 : vector<16x32xf32>
      %146 = math.exp %145 : vector<16x32xf32>
      %cst_47 = arith.constant 1.000000e+00 : f32
      %147 = vector.broadcast %cst_47 : f32 to vector<16x32xf32>
      %148 = arith.subf %146, %147 : vector<16x32xf32>
      %149 = arith.select %143, %141, %148 : vector<16x32xi1>, vector<16x32xf32>
      %150 = arith.addf %78, %149 : vector<16x32xf32>
      %151 = arith.index_cast %arg15 : i32 to index
      %c0_48 = arith.constant 0 : index
      %c0_49 = arith.constant 0 : index
      %152 = vector.load %arg7[%151, %c0_48, %c0_49] : memref<32x32x32xf32, #tpu.memory_space<vmem>>, vector<1x32x32xf32>
      %153 = vector.shape_cast %152 : vector<1x32x32xf32> to vector<32x32xf32>
      %cst_50 = arith.constant dense<0.000000e+00> : vector<16x32xf32>
      %154 = tpu.matmul %150, %153, %cst_50 {dimension_numbers = #tpu.dot_dimension_numbers<[1], [0], [0], [1], [0, 0, 1, 1], [], []>} : vector<16x32xf32>, vector<32x32xf32>, vector<16x32xf32> -> vector<16x32xf32>
      %155 = arith.index_cast %arg15 : i32 to index
      %c0_51 = arith.constant 0 : index
      %c0_52 = arith.constant 0 : index
      %156 = vector.load %arg8[%155, %c0_51, %c0_52] : memref<32x1x32xf32, #tpu.memory_space<vmem>>, vector<1x1x32xf32>
      %157 = vector.shape_cast %156 : vector<1x1x32xf32> to vector<1x32xf32>
      %158 = vector.broadcast %157 : vector<1x32xf32> to vector<16x32xf32>
      %159 = arith.addf %154, %158 : vector<16x32xf32>
      %c0_53 = arith.constant 0 : index
      %c0_54 = arith.constant 0 : index
      %160 = vector.load %arg14[%c0_53, %c0_54] : memref<16x32xf32, #tpu.memory_space<vmem>>, vector<16x32xf32>
      tpu.vector_store %arg14[%c0_53, %c0_54], %159 {strides = array<i32>} : memref<16x32xf32, #tpu.memory_space<vmem>>, vector<16x32xf32>,
      %c1_i32_55 = arith.constant 1 : i32
      %161 = arith.andi %arg15, %c1_i32_55 : i32
      %c1_i32_56 = arith.constant 1 : i32
      %162 = arith.cmpi eq, %161, %c1_i32_56 : i32
      %c0_i32_57 = arith.constant 0 : i32
      %163 = arith.addi %arg16, %c0_i32_57 : i32
      %164 = arith.extui %162 : i1 to i32
      %c0_i32_58 = arith.constant 0 : i32
      %165 = arith.cmpi ne, %164, %c0_i32_58 : i32
      scf.if %165 {
        %c0_80 = arith.constant 0 : index
        %c0_81 = arith.constant 0 : index
        %208 = vector.load %arg14[%c0_80, %c0_81] : memref<16x32xf32, #tpu.memory_space<vmem>>, vector<16x32xf32>
        %cst_82 = arith.constant 0.000000e+00 : f32
        %209 = vector.broadcast %cst_82 : f32 to vector<16x32xf32>
        %210 = arith.maximumf %208, %209 : vector<16x32xf32>
        %c0_83 = arith.constant 0 : index
        %c0_84 = arith.constant 0 : index
        %c0_85 = arith.constant 0 : index
        %211 = vector.load %arg12[%c0_83, %c0_84, %c0_85] : memref<6x16x32xf32, #tpu.memory_space<vmem>>, vector<1x16x32xf32>
        %212 = vector.shape_cast %211 : vector<1x16x32xf32> to vector<16x32xf32>
        %213 = arith.addf %212, %210 : vector<16x32xf32>
        %214 = arith.index_cast %163 : i32 to index
        %c0_86 = arith.constant 0 : index
        %c0_87 = arith.constant 0 : index
        %215 = vector.load %arg9[%214, %c0_86, %c0_87] : memref<31x32x32xf32, #tpu.memory_space<vmem>>, vector<1x32x32xf32>
        %216 = vector.shape_cast %215 : vector<1x32x32xf32> to vector<32x32xf32>
        %cst_88 = arith.constant dense<0.000000e+00> : vector<16x32xf32>
        %217 = tpu.matmul %213, %216, %cst_88 {dimension_numbers = #tpu.dot_dimension_numbers<[1], [0], [0], [1], [0, 0, 1, 1], [], []>} : vector<16x32xf32>, vector<32x32xf32>, vector<16x32xf32> -> vector<16x32xf32>
        %218 = arith.index_cast %163 : i32 to index
        %c0_89 = arith.constant 0 : index
        %c0_90 = arith.constant 0 : index
        %219 = vector.load %arg10[%218, %c0_89, %c0_90] : memref<31x1x32xf32, #tpu.memory_space<vmem>>, vector<1x1x32xf32>
        %220 = vector.shape_cast %219 : vector<1x1x32xf32> to vector<1x32xf32>
        %221 = vector.broadcast %220 : vector<1x32xf32> to vector<16x32xf32>
        %222 = arith.addf %217, %221 : vector<16x32xf32>
        %c0_91 = arith.constant 0 : index
        %c0_92 = arith.constant 0 : index
        %223 = vector.load %arg14[%c0_91, %c0_92] : memref<16x32xf32, #tpu.memory_space<vmem>>, vector<16x32xf32>
        tpu.vector_store %arg14[%c0_91, %c0_92], %222 {strides = array<i32>} : memref<16x32xf32, #tpu.memory_space<vmem>>, vector<16x32xf32>,
      } else {
      }
      %166 = arith.extui %162 : i1 to i32
      %c0_i32_59 = arith.constant 0 : i32
      %167 = arith.addi %c0_i32_59, %166 : i32
      %c3_i32 = arith.constant 3 : i32
      %168 = arith.andi %arg15, %c3_i32 : i32
      %c3_i32_60 = arith.constant 3 : i32
      %169 = arith.cmpi eq, %168, %c3_i32_60 : i32
      %c1_i32_61 = arith.constant 1 : i32
      %170 = arith.addi %arg16, %c1_i32_61 : i32
      %171 = arith.extui %169 : i1 to i32
      %c0_i32_62 = arith.constant 0 : i32
      %172 = arith.cmpi ne, %171, %c0_i32_62 : i32
      scf.if %172 {
        %c0_80 = arith.constant 0 : index
        %c0_81 = arith.constant 0 : index
        %208 = vector.load %arg14[%c0_80, %c0_81] : memref<16x32xf32, #tpu.memory_space<vmem>>, vector<16x32xf32>
        %cst_82 = arith.constant 0.000000e+00 : f32
        %209 = vector.broadcast %cst_82 : f32 to vector<16x32xf32>
        %210 = arith.maximumf %208, %209 : vector<16x32xf32>
        %c1 = arith.constant 1 : index
        %c0_83 = arith.constant 0 : index
        %c0_84 = arith.constant 0 : index
        %211 = vector.load %arg12[%c1, %c0_83, %c0_84] : memref<6x16x32xf32, #tpu.memory_space<vmem>>, vector<1x16x32xf32>
        %212 = vector.shape_cast %211 : vector<1x16x32xf32> to vector<16x32xf32>
        %213 = arith.addf %212, %210 : vector<16x32xf32>
        %214 = arith.index_cast %170 : i32 to index
        %c0_85 = arith.constant 0 : index
        %c0_86 = arith.constant 0 : index
        %215 = vector.load %arg9[%214, %c0_85, %c0_86] : memref<31x32x32xf32, #tpu.memory_space<vmem>>, vector<1x32x32xf32>
        %216 = vector.shape_cast %215 : vector<1x32x32xf32> to vector<32x32xf32>
        %cst_87 = arith.constant dense<0.000000e+00> : vector<16x32xf32>
        %217 = tpu.matmul %213, %216, %cst_87 {dimension_numbers = #tpu.dot_dimension_numbers<[1], [0], [0], [1], [0, 0, 1, 1], [], []>} : vector<16x32xf32>, vector<32x32xf32>, vector<16x32xf32> -> vector<16x32xf32>
        %218 = arith.index_cast %170 : i32 to index
        %c0_88 = arith.constant 0 : index
        %c0_89 = arith.constant 0 : index
        %219 = vector.load %arg10[%218, %c0_88, %c0_89] : memref<31x1x32xf32, #tpu.memory_space<vmem>>, vector<1x1x32xf32>
        %220 = vector.shape_cast %219 : vector<1x1x32xf32> to vector<1x32xf32>
        %221 = vector.broadcast %220 : vector<1x32xf32> to vector<16x32xf32>
        %222 = arith.addf %217, %221 : vector<16x32xf32>
        %c0_90 = arith.constant 0 : index
        %c0_91 = arith.constant 0 : index
        %223 = vector.load %arg14[%c0_90, %c0_91] : memref<16x32xf32, #tpu.memory_space<vmem>>, vector<16x32xf32>
        tpu.vector_store %arg14[%c0_90, %c0_91], %222 {strides = array<i32>} : memref<16x32xf32, #tpu.memory_space<vmem>>, vector<16x32xf32>,
      } else {
      }
      %173 = arith.extui %169 : i1 to i32
      %174 = arith.addi %167, %173 : i32
      %c7_i32 = arith.constant 7 : i32
      %175 = arith.andi %arg15, %c7_i32 : i32
      %c7_i32_63 = arith.constant 7 : i32
      %176 = arith.cmpi eq, %175, %c7_i32_63 : i32
      %c2_i32_64 = arith.constant 2 : i32
      %177 = arith.addi %arg16, %c2_i32_64 : i32
      %178 = arith.extui %176 : i1 to i32
      %c0_i32_65 = arith.constant 0 : i32
      %179 = arith.cmpi ne, %178, %c0_i32_65 : i32
      scf.if %179 {
        %c0_80 = arith.constant 0 : index
        %c0_81 = arith.constant 0 : index
        %208 = vector.load %arg14[%c0_80, %c0_81] : memref<16x32xf32, #tpu.memory_space<vmem>>, vector<16x32xf32>
        %cst_82 = arith.constant 0.000000e+00 : f32
        %209 = vector.broadcast %cst_82 : f32 to vector<16x32xf32>
        %210 = arith.maximumf %208, %209 : vector<16x32xf32>
        %c2 = arith.constant 2 : index
        %c0_83 = arith.constant 0 : index
        %c0_84 = arith.constant 0 : index
        %211 = vector.load %arg12[%c2, %c0_83, %c0_84] : memref<6x16x32xf32, #tpu.memory_space<vmem>>, vector<1x16x32xf32>
        %212 = vector.shape_cast %211 : vector<1x16x32xf32> to vector<16x32xf32>
        %213 = arith.addf %212, %210 : vector<16x32xf32>
        %214 = arith.index_cast %177 : i32 to index
        %c0_85 = arith.constant 0 : index
        %c0_86 = arith.constant 0 : index
        %215 = vector.load %arg9[%214, %c0_85, %c0_86] : memref<31x32x32xf32, #tpu.memory_space<vmem>>, vector<1x32x32xf32>
        %216 = vector.shape_cast %215 : vector<1x32x32xf32> to vector<32x32xf32>
        %cst_87 = arith.constant dense<0.000000e+00> : vector<16x32xf32>
        %217 = tpu.matmul %213, %216, %cst_87 {dimension_numbers = #tpu.dot_dimension_numbers<[1], [0], [0], [1], [0, 0, 1, 1], [], []>} : vector<16x32xf32>, vector<32x32xf32>, vector<16x32xf32> -> vector<16x32xf32>
        %218 = arith.index_cast %177 : i32 to index
        %c0_88 = arith.constant 0 : index
        %c0_89 = arith.constant 0 : index
        %219 = vector.load %arg10[%218, %c0_88, %c0_89] : memref<31x1x32xf32, #tpu.memory_space<vmem>>, vector<1x1x32xf32>
        %220 = vector.shape_cast %219 : vector<1x1x32xf32> to vector<1x32xf32>
        %221 = vector.broadcast %220 : vector<1x32xf32> to vector<16x32xf32>
        %222 = arith.addf %217, %221 : vector<16x32xf32>
        %c0_90 = arith.constant 0 : index
        %c0_91 = arith.constant 0 : index
        %223 = vector.load %arg14[%c0_90, %c0_91] : memref<16x32xf32, #tpu.memory_space<vmem>>, vector<16x32xf32>
        tpu.vector_store %arg14[%c0_90, %c0_91], %222 {strides = array<i32>} : memref<16x32xf32, #tpu.memory_space<vmem>>, vector<16x32xf32>,
      } else {
      }
      %180 = arith.extui %176 : i1 to i32
      %181 = arith.addi %174, %180 : i32
      %c15_i32 = arith.constant 15 : i32
      %182 = arith.andi %arg15, %c15_i32 : i32
      %c15_i32_66 = arith.constant 15 : i32
      %183 = arith.cmpi eq, %182, %c15_i32_66 : i32
      %c3_i32_67 = arith.constant 3 : i32
      %184 = arith.addi %arg16, %c3_i32_67 : i32
      %185 = arith.extui %183 : i1 to i32
      %c0_i32_68 = arith.constant 0 : i32
      %186 = arith.cmpi ne, %185, %c0_i32_68 : i32
      scf.if %186 {
        %c0_80 = arith.constant 0 : index
        %c0_81 = arith.constant 0 : index
        %208 = vector.load %arg14[%c0_80, %c0_81] : memref<16x32xf32, #tpu.memory_space<vmem>>, vector<16x32xf32>
        %cst_82 = arith.constant 0.000000e+00 : f32
        %209 = vector.broadcast %cst_82 : f32 to vector<16x32xf32>
        %210 = arith.maximumf %208, %209 : vector<16x32xf32>
        %c3 = arith.constant 3 : index
        %c0_83 = arith.constant 0 : index
        %c0_84 = arith.constant 0 : index
        %211 = vector.load %arg12[%c3, %c0_83, %c0_84] : memref<6x16x32xf32, #tpu.memory_space<vmem>>, vector<1x16x32xf32>
        %212 = vector.shape_cast %211 : vector<1x16x32xf32> to vector<16x32xf32>
        %213 = arith.addf %212, %210 : vector<16x32xf32>
        %214 = arith.index_cast %184 : i32 to index
        %c0_85 = arith.constant 0 : index
        %c0_86 = arith.constant 0 : index
        %215 = vector.load %arg9[%214, %c0_85, %c0_86] : memref<31x32x32xf32, #tpu.memory_space<vmem>>, vector<1x32x32xf32>
        %216 = vector.shape_cast %215 : vector<1x32x32xf32> to vector<32x32xf32>
        %cst_87 = arith.constant dense<0.000000e+00> : vector<16x32xf32>
        %217 = tpu.matmul %213, %216, %cst_87 {dimension_numbers = #tpu.dot_dimension_numbers<[1], [0], [0], [1], [0, 0, 1, 1], [], []>} : vector<16x32xf32>, vector<32x32xf32>, vector<16x32xf32> -> vector<16x32xf32>
        %218 = arith.index_cast %184 : i32 to index
        %c0_88 = arith.constant 0 : index
        %c0_89 = arith.constant 0 : index
        %219 = vector.load %arg10[%218, %c0_88, %c0_89] : memref<31x1x32xf32, #tpu.memory_space<vmem>>, vector<1x1x32xf32>
        %220 = vector.shape_cast %219 : vector<1x1x32xf32> to vector<1x32xf32>
        %221 = vector.broadcast %220 : vector<1x32xf32> to vector<16x32xf32>
        %222 = arith.addf %217, %221 : vector<16x32xf32>
        %c0_90 = arith.constant 0 : index
        %c0_91 = arith.constant 0 : index
        %223 = vector.load %arg14[%c0_90, %c0_91] : memref<16x32xf32, #tpu.memory_space<vmem>>, vector<16x32xf32>
        tpu.vector_store %arg14[%c0_90, %c0_91], %222 {strides = array<i32>} : memref<16x32xf32, #tpu.memory_space<vmem>>, vector<16x32xf32>,
      } else {
      }
      %187 = arith.extui %183 : i1 to i32
      %188 = arith.addi %181, %187 : i32
      %c31_i32 = arith.constant 31 : i32
      %189 = arith.andi %arg15, %c31_i32 : i32
      %c31_i32_69 = arith.constant 31 : i32
      %190 = arith.cmpi eq, %189, %c31_i32_69 : i32
      %c4_i32 = arith.constant 4 : i32
      %191 = arith.addi %arg16, %c4_i32 : i32
      %192 = arith.extui %190 : i1 to i32
      %c0_i32_70 = arith.constant 0 : i32
      %193 = arith.cmpi ne, %192, %c0_i32_70 : i32
      scf.if %193 {
        %c0_80 = arith.constant 0 : index
        %c0_81 = arith.constant 0 : index
        %208 = vector.load %arg14[%c0_80, %c0_81] : memref<16x32xf32, #tpu.memory_space<vmem>>, vector<16x32xf32>
        %cst_82 = arith.constant 0.000000e+00 : f32
        %209 = vector.broadcast %cst_82 : f32 to vector<16x32xf32>
        %210 = arith.maximumf %208, %209 : vector<16x32xf32>
        %c4 = arith.constant 4 : index
        %c0_83 = arith.constant 0 : index
        %c0_84 = arith.constant 0 : index
        %211 = vector.load %arg12[%c4, %c0_83, %c0_84] : memref<6x16x32xf32, #tpu.memory_space<vmem>>, vector<1x16x32xf32>
        %212 = vector.shape_cast %211 : vector<1x16x32xf32> to vector<16x32xf32>
        %213 = arith.addf %212, %210 : vector<16x32xf32>
        %214 = arith.index_cast %191 : i32 to index
        %c0_85 = arith.constant 0 : index
        %c0_86 = arith.constant 0 : index
        %215 = vector.load %arg9[%214, %c0_85, %c0_86] : memref<31x32x32xf32, #tpu.memory_space<vmem>>, vector<1x32x32xf32>
        %216 = vector.shape_cast %215 : vector<1x32x32xf32> to vector<32x32xf32>
        %cst_87 = arith.constant dense<0.000000e+00> : vector<16x32xf32>
        %217 = tpu.matmul %213, %216, %cst_87 {dimension_numbers = #tpu.dot_dimension_numbers<[1], [0], [0], [1], [0, 0, 1, 1], [], []>} : vector<16x32xf32>, vector<32x32xf32>, vector<16x32xf32> -> vector<16x32xf32>
        %218 = arith.index_cast %191 : i32 to index
        %c0_88 = arith.constant 0 : index
        %c0_89 = arith.constant 0 : index
        %219 = vector.load %arg10[%218, %c0_88, %c0_89] : memref<31x1x32xf32, #tpu.memory_space<vmem>>, vector<1x1x32xf32>
        %220 = vector.shape_cast %219 : vector<1x1x32xf32> to vector<1x32xf32>
        %221 = vector.broadcast %220 : vector<1x32xf32> to vector<16x32xf32>
        %222 = arith.addf %217, %221 : vector<16x32xf32>
        %c0_90 = arith.constant 0 : index
        %c0_91 = arith.constant 0 : index
        %223 = vector.load %arg14[%c0_90, %c0_91] : memref<16x32xf32, #tpu.memory_space<vmem>>, vector<16x32xf32>
        tpu.vector_store %arg14[%c0_90, %c0_91], %222 {strides = array<i32>} : memref<16x32xf32, #tpu.memory_space<vmem>>, vector<16x32xf32>,
      } else {
      }
      %194 = arith.extui %190 : i1 to i32
      %195 = arith.addi %188, %194 : i32
      %c0_71 = arith.constant 0 : index
      %c0_72 = arith.constant 0 : index
      %196 = vector.load %arg14[%c0_71, %c0_72] : memref<16x32xf32, #tpu.memory_space<vmem>>, vector<16x32xf32>
      %cst_73 = arith.constant 0.000000e+00 : f32
      %197 = vector.broadcast %cst_73 : f32 to vector<16x32xf32>
      %198 = arith.maximumf %196, %197 : vector<16x32xf32>
      %199 = arith.index_cast %195 : i32 to index
      %c0_74 = arith.constant 0 : index
      %c0_75 = arith.constant 0 : index
      %200 = vector.load %arg12[%199, %c0_74, %c0_75] : memref<6x16x32xf32, #tpu.memory_space<vmem>>, vector<1x16x32xf32>
      %201 = vector.shape_cast %200 : vector<1x16x32xf32> to vector<16x32xf32>
      %202 = vector.shape_cast %198 : vector<16x32xf32> to vector<1x16x32xf32>
      tpu.vector_store %arg12[%199, %c0_74, %c0_75], %202 {strides = array<i32>} : memref<6x16x32xf32, #tpu.memory_space<vmem>>, vector<1x16x32xf32>,
      %c0_76 = arith.constant 0 : index
      %c0_77 = arith.constant 0 : index
      %203 = vector.load %arg13[%c0_76, %c0_77] : memref<16x32xf32, #tpu.memory_space<vmem>>, vector<16x32xf32>
      tpu.vector_store %arg13[%c0_76, %c0_77], %198 {strides = array<i32>} : memref<16x32xf32, #tpu.memory_space<vmem>>, vector<16x32xf32>,
      %c31_i32_78 = arith.constant 31 : i32
      %204 = arith.cmpi eq, %arg15, %c31_i32_78 : i32
      %205 = arith.extui %204 : i1 to i32
      %c0_i32_79 = arith.constant 0 : i32
      %206 = arith.cmpi ne, %205, %c0_i32_79 : i32
      scf.if %206 {
        %c0_80 = arith.constant 0 : index
        %c0_81 = arith.constant 0 : index
        %208 = vector.load %arg11[%c0_80, %c0_81] : memref<16x32xf32, #tpu.memory_space<vmem>>, vector<16x32xf32>
        tpu.vector_store %arg11[%c0_80, %c0_81], %196 {strides = array<i32>} : memref<16x32xf32, #tpu.memory_space<vmem>>, vector<16x32xf32>,
      } else {
      }
      %207 = arith.addi %arg16, %195 : i32
      scf.yield %207 : i32
    }
    %c32_i32_11 = arith.constant 32 : i32
    return
  }
  func.func @transform_0(%arg0: i32) -> (i32, i32) {
    %c0_i32 = arith.constant 0 : i32
    %c0_i32_0 = arith.constant 0 : i32
    %c0_i32_1 = arith.constant 0 : i32
    return %c0_i32, %c0_i32_0 : i32, i32
  }
  func.func @transform_1(%arg0: i32) -> (i32, i32) {
    %c0_i32 = arith.constant 0 : i32
    %c0_i32_0 = arith.constant 0 : i32
    %c0_i32_1 = arith.constant 0 : i32
    return %c0_i32, %c0_i32_0 : i32, i32
  }
  func.func @transform_2(%arg0: i32) -> (i32, i32) {
    %c0_i32 = arith.constant 0 : i32
    %c0_i32_0 = arith.constant 0 : i32
    %c0_i32_1 = arith.constant 0 : i32
    return %c0_i32, %c0_i32_0 : i32, i32
  }
  func.func @transform_3(%arg0: i32) -> (i32, i32, i32) {
    %c0_i32 = arith.constant 0 : i32
    %c0_i32_0 = arith.constant 0 : i32
    %c0_i32_1 = arith.constant 0 : i32
    %c0_i32_2 = arith.constant 0 : i32
    return %c0_i32, %c0_i32_0, %c0_i32_1 : i32, i32, i32
  }
  func.func @transform_4(%arg0: i32) -> (i32, i32, i32) {
    %c0_i32 = arith.constant 0 : i32
    %c0_i32_0 = arith.constant 0 : i32
    %c0_i32_1 = arith.constant 0 : i32
    %c0_i32_2 = arith.constant 0 : i32
    return %c0_i32, %c0_i32_0, %c0_i32_1 : i32, i32, i32
  }
  func.func @transform_5(%arg0: i32) -> (i32, i32, i32) {
    %c0_i32 = arith.constant 0 : i32
    %c0_i32_0 = arith.constant 0 : i32
    %c0_i32_1 = arith.constant 0 : i32
    %c0_i32_2 = arith.constant 0 : i32
    return %c0_i32, %c0_i32_0, %c0_i32_1 : i32, i32, i32
  }
  func.func @transform_6(%arg0: i32) -> (i32, i32, i32) {
    %c0_i32 = arith.constant 0 : i32
    %c0_i32_0 = arith.constant 0 : i32
    %c0_i32_1 = arith.constant 0 : i32
    %c0_i32_2 = arith.constant 0 : i32
    return %c0_i32, %c0_i32_0, %c0_i32_1 : i32, i32, i32
  }
  func.func @transform_7(%arg0: i32) -> (i32, i32, i32) {
    %c0_i32 = arith.constant 0 : i32
    %c0_i32_0 = arith.constant 0 : i32
    %c0_i32_1 = arith.constant 0 : i32
    %c0_i32_2 = arith.constant 0 : i32
    return %c0_i32, %c0_i32_0, %c0_i32_1 : i32, i32, i32
  }
  func.func @transform_8(%arg0: i32) -> (i32, i32, i32) {
    %c0_i32 = arith.constant 0 : i32
    %c0_i32_0 = arith.constant 0 : i32
    %c0_i32_1 = arith.constant 0 : i32
    %c0_i32_2 = arith.constant 0 : i32
    return %c0_i32, %c0_i32_0, %c0_i32_1 : i32, i32, i32
  }
  func.func @transform_9(%arg0: i32) -> (i32, i32, i32) {
    %c0_i32 = arith.constant 0 : i32
    %c0_i32_0 = arith.constant 0 : i32
    %c0_i32_1 = arith.constant 0 : i32
    %c0_i32_2 = arith.constant 0 : i32
    return %c0_i32, %c0_i32_0, %c0_i32_1 : i32, i32, i32
  }
  func.func @transform_10(%arg0: i32) -> (i32, i32) {
    %c0_i32 = arith.constant 0 : i32
    %c0_i32_0 = arith.constant 0 : i32
    %c0_i32_1 = arith.constant 0 : i32
    return %c0_i32, %c0_i32_0 : i32, i32
  }
}

</mosaic_0001>

<llo_original>
// kernel: hla64_forward.1
$region0: #{hla64_forward.1}
  #allocation0 [shape = 'u32[]', space=smem, size = 0x4, offset = 0x4, fixed_abs, tag = 'smem constant byte address 0x4 - core index']
  #allocation1 [shape = 'u32[144,128]{1,0:T(1,128)}', space=vmem, size = 0x12000, scoped, tag = 'internal scratch']
  #allocation2 [shape = 'f32[6,16,32]{2,1,0:T(8,128)}', space=vmem, size = 0xc000, scoped, tag = 'scratch operand']
  #allocation3 [shape = 'f32[16,32]{1,0:T(8,128)}', space=vmem, size = 0x2000, scoped, tag = 'scratch operand']
  #allocation4 [shape = 'f32[16,32]{1,0:T(8,128)}', space=vmem, size = 0x2000, scoped, tag = 'scratch operand']
  %s0 = inlined_call_operand.vmem [shape: f32[16,32], index: 0, kind: input, shape index: {}]
  %s1 = inlined_call_operand.vmem [shape: f32[64,16], index: 1, kind: input, shape index: {}]
  %s2 = inlined_call_operand.vmem [shape: f32[64,32], index: 2, kind: input, shape index: {}]
  %s3 = inlined_call_operand.hbm [shape: f32[64,32,36], index: 3, kind: input, shape index: {}]
  %s4 = inlined_call_operand.vmem [shape: f32[64,4,32], index: 4, kind: input, shape index: {}]
  %s5 = inlined_call_operand.vmem [shape: f32[64,1,32], index: 5, kind: input, shape index: {}]
  %s6 = inlined_call_operand.hbm [shape: f32[32,32,32], index: 6, kind: input, shape index: {}]
  %s7 = inlined_call_operand.vmem [shape: f32[32,1,32], index: 7, kind: input, shape index: {}]
  %s8 = inlined_call_operand.hbm [shape: f32[31,32,32], index: 8, kind: input, shape index: {}]
  %s9 = inlined_call_operand.vmem [shape: f32[31,1,32], index: 9, kind: input, shape index: {}]
  %s10 = inlined_call_operand.vmem [shape: f32[16,32], index: 10, kind: output, shape index: {}]
  %s11 = sld [smem:[#allocation0]]
  $region93: #{hla64_forward.1} parent=0
    _
  %s13 = ssub.s32 1, %s11
  %s14 = scalar_select 0, %s13, %s11
  $region1: #{hla64_forward.1} parent=0
    #allocation5 [shape = 'u8[1048576]{0}', space=vmem, size = 0x100000, scoped, tag = 'input window, operand 3, single buffered']
    #allocation6 [shape = 's32[1]{0}', space=sflag, size = 0x4, scoped, tag = 'scoped memory for hla64_forward.1']
    #allocation7 [shape = 'u8[524288]{0}', space=vmem, size = 0x80000, scoped, tag = 'input window, operand 6, single buffered']
    #allocation8 [shape = 's32[1]{0}', space=sflag, size = 0x4, scoped, tag = 'scoped memory for hla64_forward.1']
    #allocation9 [shape = 'u8[507904]{0}', space=vmem, size = 0x7c000, scoped, tag = 'input window, operand 8, single buffered']
    %15 = vsyncpa [#allocation6], 0
    %16 = vsyncpa [#allocation8], 0
    // Predicated region
    $region2: #{hla64_forward.1} parent=1 // pred_check
      _
    $region3: #{hla64_forward.1} parent=1 // pred_check_branch
      %18 = sbr.rel (0) target = $region5
    $region4: #{hla64_forward.1} parent=1 // pred_region
      _
    $region5: #{hla64_forward.1} parent=1 // pred_fallthru
      _
    // Predicated region
    $region6: #{hla64_forward.1} parent=1 // pred_check
      _
    $region7: #{hla64_forward.1} parent=1 // pred_check_branch
      %20 = sbr.rel (0) target = $region9
    $region8: #{hla64_forward.1} parent=1 // pred_region
      _
    $region9: #{hla64_forward.1} parent=1 // pred_fallthru
      _
    // Predicated region
    $region10: #{hla64_forward.1} parent=1 // pred_check
      _
    $region11: #{hla64_forward.1} parent=1 // pred_check_branch
      %22 = sbr.rel (0) target = $region13
    $region12: #{hla64_forward.1} parent=1 // pred_region
      _
    $region13: #{hla64_forward.1} parent=1 // pred_fallthru
      _
    // Predicated region
    $region14: #{hla64_forward.1} parent=1 // pred_check
      _
    $region15: #{hla64_forward.1} parent=1 // pred_check_branch
      %24 = sbr.rel (0) target = $region17
    $region16: #{hla64_forward.1} parent=1 // pred_region
      %s26 = ssub.s32 32768, 32768
      %27 = vsyncadd [#allocation6], %s26
      %s28 = sshll.u32 [#allocation5], 4
      %s29 = int_to_ptr.vmem [resolvable:$true] %s28
      %34 = dma.hbm_to_vmem [thread:$0]  %s3, 32768, %s29, [#allocation6], 128, 128, 8
    $region17: #{hla64_forward.1} parent=1 // pred_fallthru
      _
    // Predicated region
    $region18: #{hla64_forward.1} parent=1 // pred_check
      _
    $region19: #{hla64_forward.1} parent=1 // pred_check_branch
      %36 = sbr.rel (0) target = $region21
    $region20: #{hla64_forward.1} parent=1 // pred_region
      _
    $region21: #{hla64_forward.1} parent=1 // pred_fallthru
      _
    // Predicated region
    $region22: #{hla64_forward.1} parent=1 // pred_check
      _
    $region23: #{hla64_forward.1} parent=1 // pred_check_branch
      %38 = sbr.rel (0) target = $region25
    $region24: #{hla64_forward.1} parent=1 // pred_region
      _
    $region25: #{hla64_forward.1} parent=1 // pred_fallthru
      _
    // Predicated region
    $region26: #{hla64_forward.1} parent=1 // pred_check
      _
    $region27: #{hla64_forward.1} parent=1 // pred_check_branch
      %40 = sbr.rel (0) target = $region29
    $region28: #{hla64_forward.1} parent=1 // pred_region
      %s42 = ssub.s32 16384, 16384
      %43 = vsyncadd [#allocation8], %s42
      %s44 = sshll.u32 [#allocation7], 4
      %s45 = int_to_ptr.vmem [resolvable:$true] %s44
      %50 = dma.hbm_to_vmem [thread:$0]  %s6, 16384, %s45, [#allocation8], 128, 128, 8
    $region29: #{hla64_forward.1} parent=1 // pred_fallthru
      _
    // Predicated region
    $region30: #{hla64_forward.1} parent=1 // pred_check
      _
    $region31: #{hla64_forward.1} parent=1 // pred_check_branch
      %52 = sbr.rel (0) target = $region33
    $region32: #{hla64_forward.1} parent=1 // pred_region
      _
    $region33: #{hla64_forward.1} parent=1 // pred_fallthru
      _
    // Predicated region
    $region34: #{hla64_forward.1} parent=1 // pred_check
      _
    $region35: #{hla64_forward.1} parent=1 // pred_check_branch
      %54 = sbr.rel (0) target = $region37
    $region36: #{hla64_forward.1} parent=1 // pred_region
      %s56 = ssub.s32 15872, 15872
      %57 = vsyncadd [#allocation8], %s56
      %s58 = sshll.u32 [#allocation9], 4
      %s59 = int_to_ptr.vmem [resolvable:$true] %s58
      %64 = dma.hbm_to_vmem [thread:$0]  %s8, 15872, %s59, [#allocation8], 128, 128, 8
    $region37: #{hla64_forward.1} parent=1 // pred_fallthru
      _
    // Predicated region
    $region38: #{hla64_forward.1} parent=1 // pred_check
      _
    $region39: #{hla64_forward.1} parent=1 // pred_check_branch
      %66 = sbr.rel (0) target = $region41
    $region40: #{hla64_forward.1} parent=1 // pred_region
      _
    $region41: #{hla64_forward.1} parent=1 // pred_fallthru
      _
    // Predicated region
    $region42: #{hla64_forward.1} parent=1 // pred_check
      _
    $region43: #{hla64_forward.1} parent=1 // pred_check_branch
      %68 = sbr.rel (0) target = $region45
    $region44: #{hla64_forward.1} parent=1 // pred_region
      %69 = dma.done [#allocation6], 32768
    $region45: #{hla64_forward.1} parent=1 // pred_fallthru
      _
    // Predicated region
    $region46: #{hla64_forward.1} parent=1 // pred_check
      _
    $region47: #{hla64_forward.1} parent=1 // pred_check_branch
      %71 = sbr.rel (0) target = $region49
    $region48: #{hla64_forward.1} parent=1 // pred_region
      %72 = dma.done [#allocation8], 16384
    $region49: #{hla64_forward.1} parent=1 // pred_fallthru
      _
    // Predicated region
    $region50: #{hla64_forward.1} parent=1 // pred_check
      _
    $region51: #{hla64_forward.1} parent=1 // pred_check_branch
      %74 = sbr.rel (0) target = $region53
    $region52: #{hla64_forward.1} parent=1 // pred_region
      %75 = dma.done [#allocation8], 15872
    $region53: #{hla64_forward.1} parent=1 // pred_fallthru
      _
    %v76 = vld [vmem:[%s1] sm:$0xff]
    %v77 = vld [vmem:[%s1 + $0x8] sm:$0xff]
    %v78 = vld [vmem:[%s1 + $0x10] sm:$0xff]
    %v79 = vld [vmem:[%s1 + $0x18] sm:$0xff]
    %v80 = vld [vmem:[%s1 + $0x20] sm:$0xff]
    %v81 = vld [vmem:[%s1 + $0x28] sm:$0xff]
    %v82 = vld [vmem:[%s1 + $0x30] sm:$0xff]
    %v83 = vld [vmem:[%s1 + $0x38] sm:$0xff]
    %v84 = vld [vmem:[%s2] sm:$0xff]
    %v85 = vld [vmem:[%s2 + $0x8] sm:$0xff]
    %v86 = vld [vmem:[%s2 + $0x10] sm:$0xff]
    %v87 = vld [vmem:[%s2 + $0x18] sm:$0xff]
    %v88 = vld [vmem:[%s2 + $0x20] sm:$0xff]
    %v89 = vld [vmem:[%s2 + $0x28] sm:$0xff]
    %v90 = vld [vmem:[%s2 + $0x30] sm:$0xff]
    %v91 = vld [vmem:[%s2 + $0x38] sm:$0xff]
    %v92 = vld [vmem:[%s0] sm:$0xff]
    %v93 = vld [vmem:[%s0 + $0x8] sm:$0xff]
    %vm94 = vcmask 261120
    %95 = vst.msk [vmem:[#allocation3] sm:$0xff] %vm94, %v92
    %96 = vst.msk [vmem:[#allocation3 + $0x8] sm:$0xff] %vm94, %v93
    %97 = vst.msk [vmem:[#allocation2] sm:$0xff] %vm94, 0.0
    %98 = vst.msk [vmem:[#allocation2 + $0x8] sm:$0xff] %vm94, 0.0
    %99 = vst.msk [vmem:[#allocation2 + $0x10] sm:$0xff] %vm94, 0.0
    %100 = vst.msk [vmem:[#allocation2 + $0x18] sm:$0xff] %vm94, 0.0
    %101 = vst.msk [vmem:[#allocation2 + $0x20] sm:$0xff] %vm94, 0.0
    %102 = vst.msk [vmem:[#allocation2 + $0x28] sm:$0xff] %vm94, 0.0
    %103 = vst.msk [vmem:[#allocation2 + $0x30] sm:$0xff] %vm94, 0.0
    %104 = vst.msk [vmem:[#allocation2 + $0x38] sm:$0xff] %vm94, 0.0
    %105 = vst.msk [vmem:[#allocation2 + $0x40] sm:$0xff] %vm94, 0.0
    %106 = vst.msk [vmem:[#allocation2 + $0x48] sm:$0xff] %vm94, 0.0
    %107 = vst.msk [vmem:[#allocation2 + $0x50] sm:$0xff] %vm94, 0.0
    %108 = vst.msk [vmem:[#allocation2 + $0x58] sm:$0xff] %vm94, 0.0
    loop: start=0, step=1, limit=32
    $region54: #{hla64_forward.1} parent=1 // loop_pre_header
      _
    $region55: #{hla64_forward.1} parent=1 // loop_header
      %s110 = sphi 0, %s114
      %p111 = scmp.ge.s32.totalorder %s110, 32
      %s115 = sphi 0, %s1815
    $region56: #{hla64_forward.1} parent=1 // loop_header_branch
      %113 = sbr.rel (%p111) target = $region60
    $region57: #{hla64_forward.1} parent=1 // loop_body
      %v116 = vld [vmem:[#allocation3] sm:$0xff]
      %v117 = vld [vmem:[#allocation3 + $0x8] sm:$0xff]
      %s118 = smul.u32 %s110, 2
      %s119 = smul.u32 %s118, 32
      %s120 = scalar_lea.vmem [#allocation5], %s119
      %v121 = vld [vmem:[%s120] sm:$0xff]
      %v122 = vld [vmem:[%s120 + $0x8] sm:$0xff]
      %v123 = vld [vmem:[%s120 + $0x10] sm:$0xff]
      %v124 = vld [vmem:[%s120 + $0x18] sm:$0xff]
      %s125 = smul.u32 %s118, 4
      %s126 = scalar_lea.vmem %s4, %s125
      %v127 = vld [vmem:[%s126] sm:$0xf]
      %v129 = vsel %vm94, %v116, 0
      %v132 = vsel %vm94, %v117, 0
      %134 = vmatprep.subr.mxu0 0.0
      %135 = vmatpush1.msra.mxu0 %v121
      %136 = vmatprep.subr.mxu0 0.0
      %137 = vmatpush1.msra.mxu0 %v122
      %138 = vmatprep.subr.mxu0 0.0
      %139 = vmatpush1.msra.mxu0 %v123
      %140 = vmatprep.subr.mxu0 0.0
      %141 = vmatpush1.msra.mxu0 %v124
      %142 = vmatprep.subr.mxu0 0.0
      %143 = vmatpush1.msra.mxu0 0.0
      %144 = vmatprep.subr.mxu0 0.0
      %145 = vmatpush1.msra.mxu0 0.0
      %146 = vmatprep.subr.mxu0 0.0
      %147 = vmatpush1.msra.mxu0 0.0
      %148 = vmatprep.subr.mxu0 0.0
      %149 = vmatpush1.msra.mxu0 0.0
      %150 = vmatprep.subr.mxu0 0.0
      %151 = vmatpush1.msra.mxu0 0.0
      %152 = vmatprep.subr.mxu0 0.0
      %153 = vmatpush1.msra.mxu0 0.0
      %154 = vmatprep.subr.mxu0 0.0
      %155 = vmatpush1.msra.mxu0 0.0
      %156 = vmatprep.subr.mxu0 0.0
      %157 = vmatpush1.msra.mxu0 0.0
      %158 = vmatprep.subr.mxu0 0.0
      %159 = vmatpush1.msra.mxu0 0.0
      %160 = vmatprep.subr.mxu0 0.0
      %161 = vmatpush1.msra.mxu0 0.0
      %162 = vmatprep.subr.mxu0 0.0
      %163 = vmatpush1.msra.mxu0 0.0
      %164 = vmatprep.subr.mxu0 0.0
      %165 = vmatpush1.msra.mxu0 0.0
      %166 = vmatprep.subr.mxu0 0.0
      %167 = vmatpush1.msra.mxu0 0.0
      %168 = vmatprep.subr.mxu0 0.0
      %169 = vmatpush1.msra.mxu0 0.0
      %170 = vmatprep.subr.mxu0 0.0
      %171 = vmatpush1.msra.mxu0 0.0
      %172 = vmatprep.subr.mxu0 0.0
      %173 = vmatpush1.msra.mxu0 0.0
      %174 = vmatprep.subr.mxu0 0.0
      %175 = vmatpush1.msra.mxu0 0.0
      %176 = vmatprep.subr.mxu0 0.0
      %177 = vmatpush1.msra.mxu0 0.0
      %178 = vmatprep.subr.mxu0 0.0
      %179 = vmatpush1.msra.mxu0 0.0
      %180 = vmatprep.subr.mxu0 0.0
      %181 = vmatpush1.msra.mxu0 0.0
      %182 = vmatprep.subr.mxu0 0.0
      %183 = vmatpush1.msra.mxu0 0.0
      %184 = vmatprep.subr.mxu0 0.0
      %185 = vmatpush1.msra.mxu0 0.0
      %186 = vmatprep.subr.mxu0 0.0
      %187 = vmatpush1.msra.mxu0 0.0
      %188 = vmatprep.subr.mxu0 0.0
      %189 = vmatpush1.msra.mxu0 0.0
      %190 = vmatprep.subr.mxu0 0.0
      %191 = vmatpush1.msra.mxu0 0.0
      %192 = vmatprep.subr.mxu0 0.0
      %193 = vmatpush1.msra.mxu0 0.0
      %194 = vmatprep.subr.mxu0 0.0
      %195 = vmatpush1.msra.mxu0 0.0
      %196 = vmatprep.subr.mxu0 0.0
      %197 = vmatpush1.msra.mxu0 0.0
      %198 = vmatprep.mubr.f32.mxu0 0.0
      %199 = vmatmul.mubr.f32.gmra.mrb[0].mxu0 %v129
      %v200 = vpop.f32.mrb[0].mxu0
      %v201 = vadd.f32 0.0, %v200
      %v202 = vpop.f32.mrb[0].mxu0
      %203 = vmatprep.mubr.f32.mxu0 0.0
      %204 = vmatmul.mubr.f32.gmra.mrb[0].mxu0 %v132
      %v205 = vpop.f32.mrb[0].mxu0
      %v206 = vadd.f32 0.0, %v205
      %v207 = vpop.f32.mrb[0].mxu0
      %208 = vdwg.mxu0
      %v210 = vsel %vm94, %v127, 0
      %212 = vmatprep.subr.mxu0 0.0
      %213 = vmatpush1.xpose.msra.mxu0 %v129
      %214 = vmatprep.subr.mxu0 0.0
      %215 = vmatpush1.xpose.msra.mxu0 %v132
      %216 = vmatprep.subr.mxu0 0.0
      %217 = vmatpush1.xpose.msra.mxu0 0.0
      %218 = vmatprep.subr.mxu0 0.0
      %219 = vmatpush1.xpose.msra.mxu0 0.0
      %220 = vmatprep.subr.mxu0 0.0
      %221 = vmatpush1.xpose.msra.mxu0 0.0
      %222 = vmatprep.subr.mxu0 0.0
      %223 = vmatpush1.xpose.msra.mxu0 0.0
      %224 = vmatprep.subr.mxu0 0.0
      %225 = vmatpush1.xpose.msra.mxu0 0.0
      %226 = vmatprep.subr.mxu0 0.0
      %227 = vmatpush1.xpose.msra.mxu0 0.0
      %228 = vmatprep.subr.mxu0 0.0
      %229 = vmatpush1.xpose.msra.mxu0 0.0
      %230 = vmatprep.subr.mxu0 0.0
      %231 = vmatpush1.xpose.msra.mxu0 0.0
      %232 = vmatprep.subr.mxu0 0.0
      %233 = vmatpush1.xpose.msra.mxu0 0.0
      %234 = vmatprep.subr.mxu0 0.0
      %235 = vmatpush1.xpose.msra.mxu0 0.0
      %236 = vmatprep.subr.mxu0 0.0
      %237 = vmatpush1.xpose.msra.mxu0 0.0
      %238 = vmatprep.subr.mxu0 0.0
      %239 = vmatpush1.xpose.msra.mxu0 0.0
      %240 = vmatprep.subr.mxu0 0.0
      %241 = vmatpush1.xpose.msra.mxu0 0.0
      %242 = vmatprep.subr.mxu0 0.0
      %243 = vmatpush1.xpose.msra.mxu0 0.0
      %244 = vmatprep.subr.mxu0 0.0
      %245 = vmatpush1.xpose.msra.mxu0 0.0
      %246 = vmatprep.subr.mxu0 0.0
      %247 = vmatpush1.xpose.msra.mxu0 0.0
      %248 = vmatprep.subr.mxu0 0.0
      %249 = vmatpush1.xpose.msra.mxu0 0.0
      %250 = vmatprep.subr.mxu0 0.0
      %251 = vmatpush1.xpose.msra.mxu0 0.0
      %252 = vmatprep.subr.mxu0 0.0
      %253 = vmatpush1.xpose.msra.mxu0 0.0
      %254 = vmatprep.subr.mxu0 0.0
      %255 = vmatpush1.xpose.msra.mxu0 0.0
      %256 = vmatprep.subr.mxu0 0.0
      %257 = vmatpush1.xpose.msra.mxu0 0.0
      %258 = vmatprep.subr.mxu0 0.0
      %259 = vmatpush1.xpose.msra.mxu0 0.0
      %260 = vmatprep.subr.mxu0 0.0
      %261 = vmatpush1.xpose.msra.mxu0 0.0
      %262 = vmatprep.subr.mxu0 0.0
      %263 = vmatpush1.xpose.msra.mxu0 0.0
      %264 = vmatprep.subr.mxu0 0.0
      %265 = vmatpush1.xpose.msra.mxu0 0.0
      %266 = vmatprep.subr.mxu0 0.0
      %267 = vmatpush1.xpose.msra.mxu0 0.0
      %268 = vmatprep.subr.mxu0 0.0
      %269 = vmatpush1.xpose.msra.mxu0 0.0
      %270 = vmatprep.subr.mxu0 0.0
      %271 = vmatpush1.xpose.msra.mxu0 0.0
      %272 = vmatprep.subr.mxu0 0.0
      %273 = vmatpush1.xpose.msra.mxu0 0.0
      %274 = vmatprep.subr.mxu0 0.0
      %275 = vmatpush1.xpose.msra.mxu0 0.0
      %276 = vmatprep.mubr.f32.mxu0 0.0
      %277 = vmatmul.mubr.f32.gmra.mrb[0].mxu0 %v210
      %v278 = vpop.f32.mrb[0].mxu0
      %v279 = vadd.f32 0.0, %v278
      %v280 = vpop.f32.mrb[0].mxu0
      %281 = vdwg.mxu0
      %283 = vset.pattern.permute.xlu0 32
      %284 = vperm.xlu0 %283, %v201
      %v285 = vpop.permute.xlu0 %284
      %288 = vset.pattern.permute.xlu0 32
      %289 = vperm.xlu0 %288, %v206
      %v290 = vpop.permute.xlu0 %289
      %v292 = vlaneseq
      %v293 = vshrl.u32 %v292, 7
      %v294 = vsub.s32 0, %v293
      %v295 = vrot.slane %v279, %v294
      %v296 = vadd.f32 %v285, %v295
      %v297 = vadd.f32 %v290, %v295
      %298 = vset.pattern.permute.xlu0 33
      %299 = vperm.xlu0 %298, %v201
      %v300 = vpop.permute.xlu0 %299
      %302 = vset.pattern.permute.xlu0 33
      %303 = vperm.xlu0 %302, %v206
      %v304 = vpop.permute.xlu0 %303
      %v306 = vlaneseq
      %v307 = vshrl.u32 %v306, 7
      %v308 = vsub.s32 1, %v307
      %v309 = vrot.slane %v279, %v308
      %v310 = vadd.f32 %v300, %v309
      %v311 = vadd.f32 %v304, %v309
      %312 = vset.pattern.permute.xlu0 34
      %313 = vperm.xlu0 %312, %v201
      %v314 = vpop.permute.xlu0 %313
      %316 = vset.pattern.permute.xlu0 34
      %317 = vperm.xlu0 %316, %v206
      %v318 = vpop.permute.xlu0 %317
      %v320 = vlaneseq
      %v321 = vshrl.u32 %v320, 7
      %v322 = vsub.s32 2, %v321
      %v323 = vrot.slane %v279, %v322
      %v324 = vadd.f32 %v314, %v323
      %v325 = vadd.f32 %v318, %v323
      %326 = vset.pattern.permute.xlu0 35
      %327 = vperm.xlu0 %326, %v201
      %v328 = vpop.permute.xlu0 %327
      %330 = vset.pattern.permute.xlu0 35
      %331 = vperm.xlu0 %330, %v206
      %v332 = vpop.permute.xlu0 %331
      %v334 = vlaneseq
      %v335 = vshrl.u32 %v334, 7
      %v336 = vsub.s32 3, %v335
      %v337 = vrot.slane %v279, %v336
      %v338 = vadd.f32 %v328, %v337
      %v339 = vadd.f32 %v332, %v337
      %vm340 = vcmp.gt.f32.partialorder %v296, 0.0
      %vm341 = vcmp.gt.f32.partialorder %v297, 0.0
      %vm342 = vcmp.gt.f32.partialorder %v310, 0.0
      %vm343 = vcmp.gt.f32.partialorder %v311, 0.0
      %vm344 = vcmp.gt.f32.partialorder %v324, 0.0
      %vm345 = vcmp.gt.f32.partialorder %v325, 0.0
      %vm346 = vcmp.gt.f32.partialorder %v338, 0.0
      %vm347 = vcmp.gt.f32.partialorder %v339, 0.0
      %v348 = vmul.f32 %v296, 0.2
      %v349 = vmul.f32 %v297, 0.2
      %v350 = vmul.f32 %v310, 0.2
      %v351 = vmul.f32 %v311, 0.2
      %v352 = vmul.f32 %v324, 0.2
      %v353 = vmul.f32 %v325, 0.2
      %v354 = vmul.f32 %v338, 0.2
      %v355 = vmul.f32 %v339, 0.2
      %v356 = vsel %vm340, %v296, %v348
      %v357 = vsel %vm341, %v297, %v349
      %v358 = vsel %vm342, %v310, %v350
      %v359 = vsel %vm343, %v311, %v351
      %v360 = vsel %vm344, %v324, %v352
      %v361 = vsel %vm345, %v325, %v353
      %v362 = vsel %vm346, %v338, %v354
      %v363 = vsel %vm347, %v339, %v355
      %v364 = vadd.f32 %v356, %v76
      %v365 = vadd.f32 %v357, %v77
      %v366 = vadd.f32 %v358, %v78
      %v367 = vadd.f32 %v359, %v79
      %v368 = vadd.f32 %v360, %v80
      %v369 = vadd.f32 %v361, %v81
      %v370 = vadd.f32 %v362, %v82
      %v371 = vadd.f32 %v363, %v83
      %vm372 = vcmask 130048
      %v373 = vsel %vm372, %v364, -inf
      %374 = vmax.xlane.f32.xlu0 %v373
      %v375 = vpop.xlane.xlu0 %374
      %v376 = vsel %vm372, %v365, -inf
      %377 = vmax.xlane.f32.xlu0 %v376
      %v378 = vpop.xlane.xlu0 %377
      %v379 = vsel %vm372, %v366, -inf
      %380 = vmax.xlane.f32.xlu0 %v379
      %v381 = vpop.xlane.xlu0 %380
      %v382 = vsel %vm372, %v367, -inf
      %383 = vmax.xlane.f32.xlu0 %v382
      %v384 = vpop.xlane.xlu0 %383
      %v385 = vsel %vm372, %v368, -inf
      %386 = vmax.xlane.f32.xlu0 %v385
      %v387 = vpop.xlane.xlu0 %386
      %v388 = vsel %vm372, %v369, -inf
      %389 = vmax.xlane.f32.xlu0 %v388
      %v390 = vpop.xlane.xlu0 %389
      %v391 = vsel %vm372, %v370, -inf
      %392 = vmax.xlane.f32.xlu0 %v391
      %v393 = vpop.xlane.xlu0 %392
      %v394 = vsel %vm372, %v371, -inf
      %395 = vmax.xlane.f32.xlu0 %v394
      %v396 = vpop.xlane.xlu0 %395
      %v397 = vsub.f32 %v364, %v375
      %v398 = vsub.f32 %v365, %v378
      %v399 = vsub.f32 %v366, %v381
      %v400 = vsub.f32 %v367, %v384
      %v401 = vsub.f32 %v368, %v387
      %v402 = vsub.f32 %v369, %v390
      %v403 = vsub.f32 %v370, %v393
      %v404 = vsub.f32 %v371, %v396
      %v405 = vmul.f32 %v397, 1.442695
      %v406 = vpow.pop %v405
      %v407 = vmul.f32 %v398, 1.442695
      %v408 = vpow.pop %v407
      %v409 = vmul.f32 %v399, 1.442695
      %v410 = vpow.pop %v409
      %v411 = vmul.f32 %v400, 1.442695
      %v412 = vpow.pop %v411
      %v413 = vmul.f32 %v401, 1.442695
      %v414 = vpow.pop %v413
      %v415 = vmul.f32 %v402, 1.442695
      %v416 = vpow.pop %v415
      %v417 = vmul.f32 %v403, 1.442695
      %v418 = vpow.pop %v417
      %v419 = vmul.f32 %v404, 1.442695
      %v420 = vpow.pop %v419
      %v421 = vsel %vm372, %v406, 0.0
      %422 = vadd.xlane.f32.xlu0 %v421
      %v423 = vpop.xlane.xlu0 %422
      %v424 = vsel %vm372, %v408, 0.0
      %425 = vadd.xlane.f32.xlu0 %v424
      %v426 = vpop.xlane.xlu0 %425
      %v427 = vsel %vm372, %v410, 0.0
      %428 = vadd.xlane.f32.xlu0 %v427
      %v429 = vpop.xlane.xlu0 %428
      %v430 = vsel %vm372, %v412, 0.0
      %431 = vadd.xlane.f32.xlu0 %v430
      %v432 = vpop.xlane.xlu0 %431
      %v433 = vsel %vm372, %v414, 0.0
      %434 = vadd.xlane.f32.xlu0 %v433
      %v435 = vpop.xlane.xlu0 %434
      %v436 = vsel %vm372, %v416, 0.0
      %437 = vadd.xlane.f32.xlu0 %v436
      %v438 = vpop.xlane.xlu0 %437
      %v439 = vsel %vm372, %v418, 0.0
      %440 = vadd.xlane.f32.xlu0 %v439
      %v441 = vpop.xlane.xlu0 %440
      %v442 = vsel %vm372, %v420, 0.0
      %443 = vadd.xlane.f32.xlu0 %v442
      %v444 = vpop.xlane.xlu0 %443
      %v445 = vrcp.pop %v423
      %v446 = vrcp.pop %v426
      %v447 = vrcp.pop %v429
      %v448 = vrcp.pop %v432
      %v449 = vrcp.pop %v435
      %v450 = vrcp.pop %v438
      %v451 = vrcp.pop %v441
      %v452 = vrcp.pop %v444
      %v453 = vmul.f32 %v406, %v445
      %v454 = vmul.f32 %v408, %v446
      %v455 = vmul.f32 %v410, %v447
      %v456 = vmul.f32 %v412, %v448
      %v457 = vmul.f32 %v414, %v449
      %v458 = vmul.f32 %v416, %v450
      %v459 = vmul.f32 %v418, %v451
      %v460 = vmul.f32 %v420, %v452
      %v462 = vsel %vm372, %v453, 0
      %v465 = vsel %vm372, %v454, 0
      %v468 = vsel %vm372, %v455, 0
      %v471 = vsel %vm372, %v456, 0
      %v474 = vsel %vm372, %v457, 0
      %v477 = vsel %vm372, %v458, 0
      %v480 = vsel %vm372, %v459, 0
      %v483 = vsel %vm372, %v460, 0
      %485 = vmatprep.subr.mxu0 0.0
      %486 = vmatpush1.msra.mxu0 %v201
      %487 = vmatprep.subr.mxu0 0.0
      %488 = vmatpush1.msra.mxu0 %v206
      %489 = vmatprep.subr.mxu0 0.0
      %490 = vmatpush1.msra.mxu0 0.0
      %491 = vmatprep.subr.mxu0 0.0
      %492 = vmatpush1.msra.mxu0 0.0
      %493 = vmatprep.subr.mxu0 0.0
      %494 = vmatpush1.msra.mxu0 0.0
      %495 = vmatprep.subr.mxu0 0.0
      %496 = vmatpush1.msra.mxu0 0.0
      %497 = vmatprep.subr.mxu0 0.0
      %498 = vmatpush1.msra.mxu0 0.0
      %499 = vmatprep.subr.mxu0 0.0
      %500 = vmatpush1.msra.mxu0 0.0
      %501 = vmatprep.subr.mxu0 0.0
      %502 = vmatpush1.msra.mxu0 0.0
      %503 = vmatprep.subr.mxu0 0.0
      %504 = vmatpush1.msra.mxu0 0.0
      %505 = vmatprep.subr.mxu0 0.0
      %506 = vmatpush1.msra.mxu0 0.0
      %507 = vmatprep.subr.mxu0 0.0
      %508 = vmatpush1.msra.mxu0 0.0
      %509 = vmatprep.subr.mxu0 0.0
      %510 = vmatpush1.msra.mxu0 0.0
      %511 = vmatprep.subr.mxu0 0.0
      %512 = vmatpush1.msra.mxu0 0.0
      %513 = vmatprep.subr.mxu0 0.0
      %514 = vmatpush1.msra.mxu0 0.0
      %515 = vmatprep.subr.mxu0 0.0
      %516 = vmatpush1.msra.mxu0 0.0
      %517 = vmatprep.subr.mxu0 0.0
      %518 = vmatpush1.msra.mxu0 0.0
      %519 = vmatprep.subr.mxu0 0.0
      %520 = vmatpush1.msra.mxu0 0.0
      %521 = vmatprep.subr.mxu0 0.0
      %522 = vmatpush1.msra.mxu0 0.0
      %523 = vmatprep.subr.mxu0 0.0
      %524 = vmatpush1.msra.mxu0 0.0
      %525 = vmatprep.subr.mxu0 0.0
      %526 = vmatpush1.msra.mxu0 0.0
      %527 = vmatprep.subr.mxu0 0.0
      %528 = vmatpush1.msra.mxu0 0.0
      %529 = vmatprep.subr.mxu0 0.0
      %530 = vmatpush1.msra.mxu0 0.0
      %531 = vmatprep.subr.mxu0 0.0
      %532 = vmatpush1.msra.mxu0 0.0
      %533 = vmatprep.subr.mxu0 0.0
      %534 = vmatpush1.msra.mxu0 0.0
      %535 = vmatprep.subr.mxu0 0.0
      %536 = vmatpush1.msra.mxu0 0.0
      %537 = vmatprep.subr.mxu0 0.0
      %538 = vmatpush1.msra.mxu0 0.0
      %539 = vmatprep.subr.mxu0 0.0
      %540 = vmatpush1.msra.mxu0 0.0
      %541 = vmatprep.subr.mxu0 0.0
      %542 = vmatpush1.msra.mxu0 0.0
      %543 = vmatprep.subr.mxu0 0.0
      %544 = vmatpush1.msra.mxu0 0.0
      %545 = vmatprep.subr.mxu0 0.0
      %546 = vmatpush1.msra.mxu0 0.0
      %547 = vmatprep.subr.mxu0 0.0
      %548 = vmatpush1.msra.mxu0 0.0
      %549 = vmatprep.mubr.f32.mxu0 0.0
      %550 = vmatmul.mubr.f32.gmra.mrb[0].mxu0 %v462
      %v551 = vpop.f32.mrb[0].mxu0
      %v552 = vadd.f32 0.0, %v551
      %v553 = vpop.f32.mrb[0].mxu0
      %554 = vmatprep.mubr.f32.mxu0 0.0
      %555 = vmatmul.mubr.f32.gmra.mrb[0].mxu0 %v465
      %v556 = vpop.f32.mrb[0].mxu0
      %v557 = vadd.f32 0.0, %v556
      %v558 = vpop.f32.mrb[0].mxu0
      %559 = vmatprep.mubr.f32.mxu0 0.0
      %560 = vmatmul.mubr.f32.gmra.mrb[0].mxu0 %v468
      %v561 = vpop.f32.mrb[0].mxu0
      %v562 = vadd.f32 0.0, %v561
      %v563 = vpop.f32.mrb[0].mxu0
      %564 = vmatprep.mubr.f32.mxu0 0.0
      %565 = vmatmul.mubr.f32.gmra.mrb[0].mxu0 %v471
      %v566 = vpop.f32.mrb[0].mxu0
      %v567 = vadd.f32 0.0, %v566
      %v568 = vpop.f32.mrb[0].mxu0
      %569 = vmatprep.mubr.f32.mxu0 0.0
      %570 = vmatmul.mubr.f32.gmra.mrb[0].mxu0 %v474
      %v571 = vpop.f32.mrb[0].mxu0
      %v572 = vadd.f32 0.0, %v571
      %v573 = vpop.f32.mrb[0].mxu0
      %574 = vmatprep.mubr.f32.mxu0 0.0
      %575 = vmatmul.mubr.f32.gmra.mrb[0].mxu0 %v477
      %v576 = vpop.f32.mrb[0].mxu0
      %v577 = vadd.f32 0.0, %v576
      %v578 = vpop.f32.mrb[0].mxu0
      %579 = vmatprep.mubr.f32.mxu0 0.0
      %580 = vmatmul.mubr.f32.gmra.mrb[0].mxu0 %v480
      %v581 = vpop.f32.mrb[0].mxu0
      %v582 = vadd.f32 0.0, %v581
      %v583 = vpop.f32.mrb[0].mxu0
      %584 = vmatprep.mubr.f32.mxu0 0.0
      %585 = vmatmul.mubr.f32.gmra.mrb[0].mxu0 %v483
      %v586 = vpop.f32.mrb[0].mxu0
      %v587 = vadd.f32 0.0, %v586
      %v588 = vpop.f32.mrb[0].mxu0
      %589 = vdwg.mxu0
      %v590 = vmul.f32 %v552, %v84
      %v591 = vmul.f32 %v557, %v85
      %v592 = vmul.f32 %v562, %v86
      %v593 = vmul.f32 %v567, %v87
      %v594 = vmul.f32 %v572, %v88
      %v595 = vmul.f32 %v577, %v89
      %v596 = vmul.f32 %v582, %v90
      %v597 = vmul.f32 %v587, %v91
      %s598 = scalar_lea.vmem %s5, %s118
      %v599 = vld [vmem:[%s598] sm:$0x1]
      %v601 = vlaneseq
      %v602 = vshrl.u32 %v601, 7
      %v603 = vsub.s32 0, %v602
      %v604 = vrot.slane %v599, %v603
      %v606 = vadd.f32 %v604, %v590
      %v607 = vadd.f32 %v604, %v591
      %v608 = vadd.f32 %v606, %v592
      %v609 = vadd.f32 %v607, %v593
      %v610 = vadd.f32 %v608, %v594
      %v611 = vadd.f32 %v609, %v595
      %v612 = vadd.f32 %v610, %v596
      %v613 = vadd.f32 %v611, %v597
      %vm614 = vcmp.gt.f32.partialorder %v612, 0.0
      %vm615 = vcmp.gt.f32.partialorder %v613, 0.0
      %v616 = vmin.f32 %v612, 0.0
      %v617 = vmin.f32 %v613, 0.0
      %v618 = vmul.f32 %v616, 1.442695
      %v619 = vpow.pop %v618
      %v620 = vmul.f32 %v617, 1.442695
      %v621 = vpow.pop %v620
      %v622 = vsub.f32 %v619, 1.0
      %v623 = vsub.f32 %v621, 1.0
      %v624 = vsel %vm614, %v612, %v622
      %v625 = vsel %vm615, %v613, %v623
      %s626 = sadd.s32 %s118, 1
      %s627 = smul.u32 %s626, 32
      %s628 = scalar_lea.vmem [#allocation5], %s627
      %v629 = vld [vmem:[%s628] sm:$0xff]
      %v630 = vld [vmem:[%s628 + $0x8] sm:$0xff]
      %v631 = vld [vmem:[%s628 + $0x10] sm:$0xff]
      %v632 = vld [vmem:[%s628 + $0x18] sm:$0xff]
      %s633 = smul.u32 %s626, 4
      %s634 = scalar_lea.vmem %s4, %s633
      %v635 = vld [vmem:[%s634] sm:$0xf]
      %v637 = vsel %vm94, %v624, 0
      %v640 = vsel %vm94, %v625, 0
      %642 = vmatprep.subr.mxu0 0.0
      %643 = vmatpush1.msra.mxu0 %v629
      %644 = vmatprep.subr.mxu0 0.0
      %645 = vmatpush1.msra.mxu0 %v630
      %646 = vmatprep.subr.mxu0 0.0
      %647 = vmatpush1.msra.mxu0 %v631
      %648 = vmatprep.subr.mxu0 0.0
      %649 = vmatpush1.msra.mxu0 %v632
      %650 = vmatprep.subr.mxu0 0.0
      %651 = vmatpush1.msra.mxu0 0.0
      %652 = vmatprep.subr.mxu0 0.0
      %653 = vmatpush1.msra.mxu0 0.0
      %654 = vmatprep.subr.mxu0 0.0
      %655 = vmatpush1.msra.mxu0 0.0
      %656 = vmatprep.subr.mxu0 0.0
      %657 = vmatpush1.msra.mxu0 0.0
      %658 = vmatprep.subr.mxu0 0.0
      %659 = vmatpush1.msra.mxu0 0.0
      %660 = vmatprep.subr.mxu0 0.0
      %661 = vmatpush1.msra.mxu0 0.0
      %662 = vmatprep.subr.mxu0 0.0
      %663 = vmatpush1.msra.mxu0 0.0
      %664 = vmatprep.subr.mxu0 0.0
      %665 = vmatpush1.msra.mxu0 0.0
      %666 = vmatprep.subr.mxu0 0.0
      %667 = vmatpush1.msra.mxu0 0.0
      %668 = vmatprep.subr.mxu0 0.0
      %669 = vmatpush1.msra.mxu0 0.0
      %670 = vmatprep.subr.mxu0 0.0
      %671 = vmatpush1.msra.mxu0 0.0
      %672 = vmatprep.subr.mxu0 0.0
      %673 = vmatpush1.msra.mxu0 0.0
      %674 = vmatprep.subr.mxu0 0.0
      %675 = vmatpush1.msra.mxu0 0.0
      %676 = vmatprep.subr.mxu0 0.0
      %677 = vmatpush1.msra.mxu0 0.0
      %678 = vmatprep.subr.mxu0 0.0
      %679 = vmatpush1.msra.mxu0 0.0
      %680 = vmatprep.subr.mxu0 0.0
      %681 = vmatpush1.msra.mxu0 0.0
      %682 = vmatprep.subr.mxu0 0.0
      %683 = vmatpush1.msra.mxu0 0.0
      %684 = vmatprep.subr.mxu0 0.0
      %685 = vmatpush1.msra.mxu0 0.0
      %686 = vmatprep.subr.mxu0 0.0
      %687 = vmatpush1.msra.mxu0 0.0
      %688 = vmatprep.subr.mxu0 0.0
      %689 = vmatpush1.msra.mxu0 0.0
      %690 = vmatprep.subr.mxu0 0.0
      %691 = vmatpush1.msra.mxu0 0.0
      %692 = vmatprep.subr.mxu0 0.0
      %693 = vmatpush1.msra.mxu0 0.0
      %694 = vmatprep.subr.mxu0 0.0
      %695 = vmatpush1.msra.mxu0 0.0
      %696 = vmatprep.subr.mxu0 0.0
      %697 = vmatpush1.msra.mxu0 0.0
      %698 = vmatprep.subr.mxu0 0.0
      %699 = vmatpush1.msra.mxu0 0.0
      %700 = vmatprep.subr.mxu0 0.0
      %701 = vmatpush1.msra.mxu0 0.0
      %702 = vmatprep.subr.mxu0 0.0
      %703 = vmatpush1.msra.mxu0 0.0
      %704 = vmatprep.subr.mxu0 0.0
      %705 = vmatpush1.msra.mxu0 0.0
      %706 = vmatprep.mubr.f32.mxu0 0.0
      %707 = vmatmul.mubr.f32.gmra.mrb[0].mxu0 %v637
      %v708 = vpop.f32.mrb[0].mxu0
      %v709 = vadd.f32 0.0, %v708
      %v710 = vpop.f32.mrb[0].mxu0
      %711 = vmatprep.mubr.f32.mxu0 0.0
      %712 = vmatmul.mubr.f32.gmra.mrb[0].mxu0 %v640
      %v713 = vpop.f32.mrb[0].mxu0
      %v714 = vadd.f32 0.0, %v713
      %v715 = vpop.f32.mrb[0].mxu0
      %716 = vdwg.mxu0
      %v718 = vsel %vm94, %v635, 0
      %720 = vmatprep.subr.mxu0 0.0
      %721 = vmatpush1.xpose.msra.mxu0 %v637
      %722 = vmatprep.subr.mxu0 0.0
      %723 = vmatpush1.xpose.msra.mxu0 %v640
      %724 = vmatprep.subr.mxu0 0.0
      %725 = vmatpush1.xpose.msra.mxu0 0.0
      %726 = vmatprep.subr.mxu0 0.0
      %727 = vmatpush1.xpose.msra.mxu0 0.0
      %728 = vmatprep.subr.mxu0 0.0
      %729 = vmatpush1.xpose.msra.mxu0 0.0
      %730 = vmatprep.subr.mxu0 0.0
      %731 = vmatpush1.xpose.msra.mxu0 0.0
      %732 = vmatprep.subr.mxu0 0.0
      %733 = vmatpush1.xpose.msra.mxu0 0.0
      %734 = vmatprep.subr.mxu0 0.0
      %735 = vmatpush1.xpose.msra.mxu0 0.0
      %736 = vmatprep.subr.mxu0 0.0
      %737 = vmatpush1.xpose.msra.mxu0 0.0
      %738 = vmatprep.subr.mxu0 0.0
      %739 = vmatpush1.xpose.msra.mxu0 0.0
      %740 = vmatprep.subr.mxu0 0.0
      %741 = vmatpush1.xpose.msra.mxu0 0.0
      %742 = vmatprep.subr.mxu0 0.0
      %743 = vmatpush1.xpose.msra.mxu0 0.0
      %744 = vmatprep.subr.mxu0 0.0
      %745 = vmatpush1.xpose.msra.mxu0 0.0
      %746 = vmatprep.subr.mxu0 0.0
      %747 = vmatpush1.xpose.msra.mxu0 0.0
      %748 = vmatprep.subr.mxu0 0.0
      %749 = vmatpush1.xpose.msra.mxu0 0.0
      %750 = vmatprep.subr.mxu0 0.0
      %751 = vmatpush1.xpose.msra.mxu0 0.0
      %752 = vmatprep.subr.mxu0 0.0
      %753 = vmatpush1.xpose.msra.mxu0 0.0
      %754 = vmatprep.subr.mxu0 0.0
      %755 = vmatpush1.xpose.msra.mxu0 0.0
      %756 = vmatprep.subr.mxu0 0.0
      %757 = vmatpush1.xpose.msra.mxu0 0.0
      %758 = vmatprep.subr.mxu0 0.0
      %759 = vmatpush1.xpose.msra.mxu0 0.0
      %760 = vmatprep.subr.mxu0 0.0
      %761 = vmatpush1.xpose.msra.mxu0 0.0
      %762 = vmatprep.subr.mxu0 0.0
      %763 = vmatpush1.xpose.msra.mxu0 0.0
      %764 = vmatprep.subr.mxu0 0.0
      %765 = vmatpush1.xpose.msra.mxu0 0.0
      %766 = vmatprep.subr.mxu0 0.0
      %767 = vmatpush1.xpose.msra.mxu0 0.0
      %768 = vmatprep.subr.mxu0 0.0
      %769 = vmatpush1.xpose.msra.mxu0 0.0
      %770 = vmatprep.subr.mxu0 0.0
      %771 = vmatpush1.xpose.msra.mxu0 0.0
      %772 = vmatprep.subr.mxu0 0.0
      %773 = vmatpush1.xpose.msra.mxu0 0.0
      %774 = vmatprep.subr.mxu0 0.0
      %775 = vmatpush1.xpose.msra.mxu0 0.0
      %776 = vmatprep.subr.mxu0 0.0
      %777 = vmatpush1.xpose.msra.mxu0 0.0
      %778 = vmatprep.subr.mxu0 0.0
      %779 = vmatpush1.xpose.msra.mxu0 0.0
      %780 = vmatprep.subr.mxu0 0.0
      %781 = vmatpush1.xpose.msra.mxu0 0.0
      %782 = vmatprep.subr.mxu0 0.0
      %783 = vmatpush1.xpose.msra.mxu0 0.0
      %784 = vmatprep.mubr.f32.mxu0 0.0
      %785 = vmatmul.mubr.f32.gmra.mrb[0].mxu0 %v718
      %v786 = vpop.f32.mrb[0].mxu0
      %v787 = vadd.f32 0.0, %v786
      %v788 = vpop.f32.mrb[0].mxu0
      %789 = vdwg.mxu0
      %791 = vset.pattern.permute.xlu0 32
      %792 = vperm.xlu0 %791, %v709
      %v793 = vpop.permute.xlu0 %792
      %796 = vset.pattern.permute.xlu0 32
      %797 = vperm.xlu0 %796, %v714
      %v798 = vpop.permute.xlu0 %797
      %v800 = vlaneseq
      %v801 = vshrl.u32 %v800, 7
      %v802 = vsub.s32 0, %v801
      %v803 = vrot.slane %v787, %v802
      %v804 = vadd.f32 %v793, %v803
      %v805 = vadd.f32 %v798, %v803
      %806 = vset.pattern.permute.xlu0 33
      %807 = vperm.xlu0 %806, %v709
      %v808 = vpop.permute.xlu0 %807
      %810 = vset.pattern.permute.xlu0 33
      %811 = vperm.xlu0 %810, %v714
      %v812 = vpop.permute.xlu0 %811
      %v814 = vlaneseq
      %v815 = vshrl.u32 %v814, 7
      %v816 = vsub.s32 1, %v815
      %v817 = vrot.slane %v787, %v816
      %v818 = vadd.f32 %v808, %v817
      %v819 = vadd.f32 %v812, %v817
      %820 = vset.pattern.permute.xlu0 34
      %821 = vperm.xlu0 %820, %v709
      %v822 = vpop.permute.xlu0 %821
      %824 = vset.pattern.permute.xlu0 34
      %825 = vperm.xlu0 %824, %v714
      %v826 = vpop.permute.xlu0 %825
      %v828 = vlaneseq
      %v829 = vshrl.u32 %v828, 7
      %v830 = vsub.s32 2, %v829
      %v831 = vrot.slane %v787, %v830
      %v832 = vadd.f32 %v822, %v831
      %v833 = vadd.f32 %v826, %v831
      %834 = vset.pattern.permute.xlu0 35
      %835 = vperm.xlu0 %834, %v709
      %v836 = vpop.permute.xlu0 %835
      %838 = vset.pattern.permute.xlu0 35
      %839 = vperm.xlu0 %838, %v714
      %v840 = vpop.permute.xlu0 %839
      %v842 = vlaneseq
      %v843 = vshrl.u32 %v842, 7
      %v844 = vsub.s32 3, %v843
      %v845 = vrot.slane %v787, %v844
      %v846 = vadd.f32 %v836, %v845
      %v847 = vadd.f32 %v840, %v845
      %vm848 = vcmp.gt.f32.partialorder %v804, 0.0
      %vm849 = vcmp.gt.f32.partialorder %v805, 0.0
      %vm850 = vcmp.gt.f32.partialorder %v818, 0.0
      %vm851 = vcmp.gt.f32.partialorder %v819, 0.0
      %vm852 = vcmp.gt.f32.partialorder %v832, 0.0
      %vm853 = vcmp.gt.f32.partialorder %v833, 0.0
      %vm854 = vcmp.gt.f32.partialorder %v846, 0.0
      %vm855 = vcmp.gt.f32.partialorder %v847, 0.0
      %v856 = vmul.f32 %v804, 0.2
      %v857 = vmul.f32 %v805, 0.2
      %v858 = vmul.f32 %v818, 0.2
      %v859 = vmul.f32 %v819, 0.2
      %v860 = vmul.f32 %v832, 0.2
      %v861 = vmul.f32 %v833, 0.2
      %v862 = vmul.f32 %v846, 0.2
      %v863 = vmul.f32 %v847, 0.2
      %v864 = vsel %vm848, %v804, %v856
      %v865 = vsel %vm849, %v805, %v857
      %v866 = vsel %vm850, %v818, %v858
      %v867 = vsel %vm851, %v819, %v859
      %v868 = vsel %vm852, %v832, %v860
      %v869 = vsel %vm853, %v833, %v861
      %v870 = vsel %vm854, %v846, %v862
      %v871 = vsel %vm855, %v847, %v863
      %v872 = vadd.f32 %v864, %v76
      %v873 = vadd.f32 %v865, %v77
      %v874 = vadd.f32 %v866, %v78
      %v875 = vadd.f32 %v867, %v79
      %v876 = vadd.f32 %v868, %v80
      %v877 = vadd.f32 %v869, %v81
      %v878 = vadd.f32 %v870, %v82
      %v879 = vadd.f32 %v871, %v83
      %v880 = vsel %vm372, %v872, -inf
      %881 = vmax.xlane.f32.xlu0 %v880
      %v882 = vpop.xlane.xlu0 %881
      %v883 = vsel %vm372, %v873, -inf
      %884 = vmax.xlane.f32.xlu0 %v883
      %v885 = vpop.xlane.xlu0 %884
      %v886 = vsel %vm372, %v874, -inf
      %887 = vmax.xlane.f32.xlu0 %v886
      %v888 = vpop.xlane.xlu0 %887
      %v889 = vsel %vm372, %v875, -inf
      %890 = vmax.xlane.f32.xlu0 %v889
      %v891 = vpop.xlane.xlu0 %890
      %v892 = vsel %vm372, %v876, -inf
      %893 = vmax.xlane.f32.xlu0 %v892
      %v894 = vpop.xlane.xlu0 %893
      %v895 = vsel %vm372, %v877, -inf
      %896 = vmax.xlane.f32.xlu0 %v895
      %v897 = vpop.xlane.xlu0 %896
      %v898 = vsel %vm372, %v878, -inf
      %899 = vmax.xlane.f32.xlu0 %v898
      %v900 = vpop.xlane.xlu0 %899
      %v901 = vsel %vm372, %v879, -inf
      %902 = vmax.xlane.f32.xlu0 %v901
      %v903 = vpop.xlane.xlu0 %902
      %v904 = vsub.f32 %v872, %v882
      %v905 = vsub.f32 %v873, %v885
      %v906 = vsub.f32 %v874, %v888
      %v907 = vsub.f32 %v875, %v891
      %v908 = vsub.f32 %v876, %v894
      %v909 = vsub.f32 %v877, %v897
      %v910 = vsub.f32 %v878, %v900
      %v911 = vsub.f32 %v879, %v903
      %v912 = vmul.f32 %v904, 1.442695
      %v913 = vpow.pop %v912
      %v914 = vmul.f32 %v905, 1.442695
      %v915 = vpow.pop %v914
      %v916 = vmul.f32 %v906, 1.442695
      %v917 = vpow.pop %v916
      %v918 = vmul.f32 %v907, 1.442695
      %v919 = vpow.pop %v918
      %v920 = vmul.f32 %v908, 1.442695
      %v921 = vpow.pop %v920
      %v922 = vmul.f32 %v909, 1.442695
      %v923 = vpow.pop %v922
      %v924 = vmul.f32 %v910, 1.442695
      %v925 = vpow.pop %v924
      %v926 = vmul.f32 %v911, 1.442695
      %v927 = vpow.pop %v926
      %v928 = vsel %vm372, %v913, 0.0
      %929 = vadd.xlane.f32.xlu0 %v928
      %v930 = vpop.xlane.xlu0 %929
      %v931 = vsel %vm372, %v915, 0.0
      %932 = vadd.xlane.f32.xlu0 %v931
      %v933 = vpop.xlane.xlu0 %932
      %v934 = vsel %vm372, %v917, 0.0
      %935 = vadd.xlane.f32.xlu0 %v934
      %v936 = vpop.xlane.xlu0 %935
      %v937 = vsel %vm372, %v919, 0.0
      %938 = vadd.xlane.f32.xlu0 %v937
      %v939 = vpop.xlane.xlu0 %938
      %v940 = vsel %vm372, %v921, 0.0
      %941 = vadd.xlane.f32.xlu0 %v940
      %v942 = vpop.xlane.xlu0 %941
      %v943 = vsel %vm372, %v923, 0.0
      %944 = vadd.xlane.f32.xlu0 %v943
      %v945 = vpop.xlane.xlu0 %944
      %v946 = vsel %vm372, %v925, 0.0
      %947 = vadd.xlane.f32.xlu0 %v946
      %v948 = vpop.xlane.xlu0 %947
      %v949 = vsel %vm372, %v927, 0.0
      %950 = vadd.xlane.f32.xlu0 %v949
      %v951 = vpop.xlane.xlu0 %950
      %v952 = vrcp.pop %v930
      %v953 = vrcp.pop %v933
      %v954 = vrcp.pop %v936
      %v955 = vrcp.pop %v939
      %v956 = vrcp.pop %v942
      %v957 = vrcp.pop %v945
      %v958 = vrcp.pop %v948
      %v959 = vrcp.pop %v951
      %v960 = vmul.f32 %v913, %v952
      %v961 = vmul.f32 %v915, %v953
      %v962 = vmul.f32 %v917, %v954
      %v963 = vmul.f32 %v919, %v955
      %v964 = vmul.f32 %v921, %v956
      %v965 = vmul.f32 %v923, %v957
      %v966 = vmul.f32 %v925, %v958
      %v967 = vmul.f32 %v927, %v959
      %v969 = vsel %vm372, %v960, 0
      %v972 = vsel %vm372, %v961, 0
      %v975 = vsel %vm372, %v962, 0
      %v978 = vsel %vm372, %v963, 0
      %v981 = vsel %vm372, %v964, 0
      %v984 = vsel %vm372, %v965, 0
      %v987 = vsel %vm372, %v966, 0
      %v990 = vsel %vm372, %v967, 0
      %992 = vmatprep.subr.mxu0 0.0
      %993 = vmatpush1.msra.mxu0 %v709
      %994 = vmatprep.subr.mxu0 0.0
      %995 = vmatpush1.msra.mxu0 %v714
      %996 = vmatprep.subr.mxu0 0.0
      %997 = vmatpush1.msra.mxu0 0.0
      %998 = vmatprep.subr.mxu0 0.0
      %999 = vmatpush1.msra.mxu0 0.0
      %1000 = vmatprep.subr.mxu0 0.0
      %1001 = vmatpush1.msra.mxu0 0.0
      %1002 = vmatprep.subr.mxu0 0.0
      %1003 = vmatpush1.msra.mxu0 0.0
      %1004 = vmatprep.subr.mxu0 0.0
      %1005 = vmatpush1.msra.mxu0 0.0
      %1006 = vmatprep.subr.mxu0 0.0
      %1007 = vmatpush1.msra.mxu0 0.0
      %1008 = vmatprep.subr.mxu0 0.0
      %1009 = vmatpush1.msra.mxu0 0.0
      %1010 = vmatprep.subr.mxu0 0.0
      %1011 = vmatpush1.msra.mxu0 0.0
      %1012 = vmatprep.subr.mxu0 0.0
      %1013 = vmatpush1.msra.mxu0 0.0
      %1014 = vmatprep.subr.mxu0 0.0
      %1015 = vmatpush1.msra.mxu0 0.0
      %1016 = vmatprep.subr.mxu0 0.0
      %1017 = vmatpush1.msra.mxu0 0.0
      %1018 = vmatprep.subr.mxu0 0.0
      %1019 = vmatpush1.msra.mxu0 0.0
      %1020 = vmatprep.subr.mxu0 0.0
      %1021 = vmatpush1.msra.mxu0 0.0
      %1022 = vmatprep.subr.mxu0 0.0
      %1023 = vmatpush1.msra.mxu0 0.0
      %1024 = vmatprep.subr.mxu0 0.0
      %1025 = vmatpush1.msra.mxu0 0.0
      %1026 = vmatprep.subr.mxu0 0.0
      %1027 = vmatpush1.msra.mxu0 0.0
      %1028 = vmatprep.subr.mxu0 0.0
      %1029 = vmatpush1.msra.mxu0 0.0
      %1030 = vmatprep.subr.mxu0 0.0
      %1031 = vmatpush1.msra.mxu0 0.0
      %1032 = vmatprep.subr.mxu0 0.0
      %1033 = vmatpush1.msra.mxu0 0.0
      %1034 = vmatprep.subr.mxu0 0.0
      %1035 = vmatpush1.msra.mxu0 0.0
      %1036 = vmatprep.subr.mxu0 0.0
      %1037 = vmatpush1.msra.mxu0 0.0
      %1038 = vmatprep.subr.mxu0 0.0
      %1039 = vmatpush1.msra.mxu0 0.0
      %1040 = vmatprep.subr.mxu0 0.0
      %1041 = vmatpush1.msra.mxu0 0.0
      %1042 = vmatprep.subr.mxu0 0.0
      %1043 = vmatpush1.msra.mxu0 0.0
      %1044 = vmatprep.subr.mxu0 0.0
      %1045 = vmatpush1.msra.mxu0 0.0
      %1046 = vmatprep.subr.mxu0 0.0
      %1047 = vmatpush1.msra.mxu0 0.0
      %1048 = vmatprep.subr.mxu0 0.0
      %1049 = vmatpush1.msra.mxu0 0.0
      %1050 = vmatprep.subr.mxu0 0.0
      %1051 = vmatpush1.msra.mxu0 0.0
      %1052 = vmatprep.subr.mxu0 0.0
      %1053 = vmatpush1.msra.mxu0 0.0
      %1054 = vmatprep.subr.mxu0 0.0
      %1055 = vmatpush1.msra.mxu0 0.0
      %1056 = vmatprep.mubr.f32.mxu0 0.0
      %1057 = vmatmul.mubr.f32.gmra.mrb[0].mxu0 %v969
      %v1058 = vpop.f32.mrb[0].mxu0
      %v1059 = vadd.f32 0.0, %v1058
      %v1060 = vpop.f32.mrb[0].mxu0
      %1061 = vmatprep.mubr.f32.mxu0 0.0
      %1062 = vmatmul.mubr.f32.gmra.mrb[0].mxu0 %v972
      %v1063 = vpop.f32.mrb[0].mxu0
      %v1064 = vadd.f32 0.0, %v1063
      %v1065 = vpop.f32.mrb[0].mxu0
      %1066 = vmatprep.mubr.f32.mxu0 0.0
      %1067 = vmatmul.mubr.f32.gmra.mrb[0].mxu0 %v975
      %v1068 = vpop.f32.mrb[0].mxu0
      %v1069 = vadd.f32 0.0, %v1068
      %v1070 = vpop.f32.mrb[0].mxu0
      %1071 = vmatprep.mubr.f32.mxu0 0.0
      %1072 = vmatmul.mubr.f32.gmra.mrb[0].mxu0 %v978
      %v1073 = vpop.f32.mrb[0].mxu0
      %v1074 = vadd.f32 0.0, %v1073
      %v1075 = vpop.f32.mrb[0].mxu0
      %1076 = vmatprep.mubr.f32.mxu0 0.0
      %1077 = vmatmul.mubr.f32.gmra.mrb[0].mxu0 %v981
      %v1078 = vpop.f32.mrb[0].mxu0
      %v1079 = vadd.f32 0.0, %v1078
      %v1080 = vpop.f32.mrb[0].mxu0
      %1081 = vmatprep.mubr.f32.mxu0 0.0
      %1082 = vmatmul.mubr.f32.gmra.mrb[0].mxu0 %v984
      %v1083 = vpop.f32.mrb[0].mxu0
      %v1084 = vadd.f32 0.0, %v1083
      %v1085 = vpop.f32.mrb[0].mxu0
      %1086 = vmatprep.mubr.f32.mxu0 0.0
      %1087 = vmatmul.mubr.f32.gmra.mrb[0].mxu0 %v987
      %v1088 = vpop.f32.mrb[0].mxu0
      %v1089 = vadd.f32 0.0, %v1088
      %v1090 = vpop.f32.mrb[0].mxu0
      %1091 = vmatprep.mubr.f32.mxu0 0.0
      %1092 = vmatmul.mubr.f32.gmra.mrb[0].mxu0 %v990
      %v1093 = vpop.f32.mrb[0].mxu0
      %v1094 = vadd.f32 0.0, %v1093
      %v1095 = vpop.f32.mrb[0].mxu0
      %1096 = vdwg.mxu0
      %v1097 = vmul.f32 %v1059, %v84
      %v1098 = vmul.f32 %v1064, %v85
      %v1099 = vmul.f32 %v1069, %v86
      %v1100 = vmul.f32 %v1074, %v87
      %v1101 = vmul.f32 %v1079, %v88
      %v1102 = vmul.f32 %v1084, %v89
      %v1103 = vmul.f32 %v1089, %v90
      %v1104 = vmul.f32 %v1094, %v91
      %s1105 = scalar_lea.vmem %s5, %s626
      %v1106 = vld [vmem:[%s1105] sm:$0x1]
      %v1108 = vlaneseq
      %v1109 = vshrl.u32 %v1108, 7
      %v1110 = vsub.s32 0, %v1109
      %v1111 = vrot.slane %v1106, %v1110
      %v1113 = vadd.f32 %v1111, %v1097
      %v1114 = vadd.f32 %v1111, %v1098
      %v1115 = vadd.f32 %v1113, %v1099
      %v1116 = vadd.f32 %v1114, %v1100
      %v1117 = vadd.f32 %v1115, %v1101
      %v1118 = vadd.f32 %v1116, %v1102
      %v1119 = vadd.f32 %v1117, %v1103
      %v1120 = vadd.f32 %v1118, %v1104
      %vm1121 = vcmp.gt.f32.partialorder %v1119, 0.0
      %vm1122 = vcmp.gt.f32.partialorder %v1120, 0.0
      %v1123 = vmin.f32 %v1119, 0.0
      %v1124 = vmin.f32 %v1120, 0.0
      %v1125 = vmul.f32 %v1123, 1.442695
      %v1126 = vpow.pop %v1125
      %v1127 = vmul.f32 %v1124, 1.442695
      %v1128 = vpow.pop %v1127
      %v1129 = vsub.f32 %v1126, 1.0
      %v1130 = vsub.f32 %v1128, 1.0
      %v1131 = vsel %vm1121, %v1119, %v1129
      %v1132 = vsel %vm1122, %v1120, %v1130
      %v1133 = vadd.f32 %v624, %v1131
      %v1134 = vadd.f32 %v625, %v1132
      %s1135 = smul.u32 %s110, 32
      %s1136 = scalar_lea.vmem [#allocation7], %s1135
      %v1137 = vld [vmem:[%s1136] sm:$0xff]
      %v1138 = vld [vmem:[%s1136 + $0x8] sm:$0xff]
      %v1139 = vld [vmem:[%s1136 + $0x10] sm:$0xff]
      %v1140 = vld [vmem:[%s1136 + $0x18] sm:$0xff]
      %s1141 = scalar_lea.vmem %s7, %s110
      %v1142 = vld [vmem:[%s1141] sm:$0x1]
      %v1144 = vlaneseq
      %v1145 = vshrl.u32 %v1144, 7
      %v1146 = vsub.s32 0, %v1145
      %v1147 = vrot.slane %v1142, %v1146
      %v1150 = vsel %vm94, %v1133, 0
      %v1153 = vsel %vm94, %v1134, 0
      %1155 = vmatprep.subr.mxu0 0.0
      %1156 = vmatpush1.msra.mxu0 %v1137
      %1157 = vmatprep.subr.mxu0 0.0
      %1158 = vmatpush1.msra.mxu0 %v1138
      %1159 = vmatprep.subr.mxu0 0.0
      %1160 = vmatpush1.msra.mxu0 %v1139
      %1161 = vmatprep.subr.mxu0 0.0
      %1162 = vmatpush1.msra.mxu0 %v1140
      %1163 = vmatprep.subr.mxu0 0.0
      %1164 = vmatpush1.msra.mxu0 0.0
      %1165 = vmatprep.subr.mxu0 0.0
      %1166 = vmatpush1.msra.mxu0 0.0
      %1167 = vmatprep.subr.mxu0 0.0
      %1168 = vmatpush1.msra.mxu0 0.0
      %1169 = vmatprep.subr.mxu0 0.0
      %1170 = vmatpush1.msra.mxu0 0.0
      %1171 = vmatprep.subr.mxu0 0.0
      %1172 = vmatpush1.msra.mxu0 0.0
      %1173 = vmatprep.subr.mxu0 0.0
      %1174 = vmatpush1.msra.mxu0 0.0
      %1175 = vmatprep.subr.mxu0 0.0
      %1176 = vmatpush1.msra.mxu0 0.0
      %1177 = vmatprep.subr.mxu0 0.0
      %1178 = vmatpush1.msra.mxu0 0.0
      %1179 = vmatprep.subr.mxu0 0.0
      %1180 = vmatpush1.msra.mxu0 0.0
      %1181 = vmatprep.subr.mxu0 0.0
      %1182 = vmatpush1.msra.mxu0 0.0
      %1183 = vmatprep.subr.mxu0 0.0
      %1184 = vmatpush1.msra.mxu0 0.0
      %1185 = vmatprep.subr.mxu0 0.0
      %1186 = vmatpush1.msra.mxu0 0.0
      %1187 = vmatprep.subr.mxu0 0.0
      %1188 = vmatpush1.msra.mxu0 0.0
      %1189 = vmatprep.subr.mxu0 0.0
      %1190 = vmatpush1.msra.mxu0 0.0
      %1191 = vmatprep.subr.mxu0 0.0
      %1192 = vmatpush1.msra.mxu0 0.0
      %1193 = vmatprep.subr.mxu0 0.0
      %1194 = vmatpush1.msra.mxu0 0.0
      %1195 = vmatprep.subr.mxu0 0.0
      %1196 = vmatpush1.msra.mxu0 0.0
      %1197 = vmatprep.subr.mxu0 0.0
      %1198 = vmatpush1.msra.mxu0 0.0
      %1199 = vmatprep.subr.mxu0 0.0
      %1200 = vmatpush1.msra.mxu0 0.0
      %1201 = vmatprep.subr.mxu0 0.0
      %1202 = vmatpush1.msra.mxu0 0.0
      %1203 = vmatprep.subr.mxu0 0.0
      %1204 = vmatpush1.msra.mxu0 0.0
      %1205 = vmatprep.subr.mxu0 0.0
      %1206 = vmatpush1.msra.mxu0 0.0
      %1207 = vmatprep.subr.mxu0 0.0
      %1208 = vmatpush1.msra.mxu0 0.0
      %1209 = vmatprep.subr.mxu0 0.0
      %1210 = vmatpush1.msra.mxu0 0.0
      %1211 = vmatprep.subr.mxu0 0.0
      %1212 = vmatpush1.msra.mxu0 0.0
      %1213 = vmatprep.subr.mxu0 0.0
      %1214 = vmatpush1.msra.mxu0 0.0
      %1215 = vmatprep.subr.mxu0 0.0
      %1216 = vmatpush1.msra.mxu0 0.0
      %1217 = vmatprep.subr.mxu0 0.0
      %1218 = vmatpush1.msra.mxu0 0.0
      %1219 = vmatprep.mubr.f32.mxu0 0.0
      %1220 = vmatmul.mubr.f32.gmra.mrb[0].mxu0 %v1150
      %v1221 = vpop.f32.mrb[0].mxu0
      %v1222 = vadd.f32 %v1147, %v1221
      %v1223 = vpop.f32.mrb[0].mxu0
      %1224 = vmatprep.mubr.f32.mxu0 0.0
      %1225 = vmatmul.mubr.f32.gmra.mrb[0].mxu0 %v1153
      %v1226 = vpop.f32.mrb[0].mxu0
      %v1227 = vadd.f32 %v1147, %v1226
      %v1228 = vpop.f32.mrb[0].mxu0
      %1229 = vdwg.mxu0
      %1230 = vst.msk [vmem:[#allocation4] sm:$0xff] %vm94, %v1222
      %1231 = vst.msk [vmem:[#allocation4 + $0x8] sm:$0xff] %vm94, %v1227
      %s1232 = sand.u32 %s110, 1
      %p1233 = scmp.eq.s32.totalorder %s1232, 1
      // Predicated region
      $region61: #{hla64_forward.1} parent=57 // pred_check
        %p1234 = pneg %p1233
      $region62: #{hla64_forward.1} parent=57 // pred_check_branch
        %1236 = sbr.rel (%p1234) target = $region64
      $region63: #{hla64_forward.1} parent=57 // pred_region
        %v1237 = vld [vmem:[#allocation4] sm:$0xff]
        %v1238 = vld [vmem:[#allocation4 + $0x8] sm:$0xff]
        %v1239 = vmax.f32 %v1237, 0.0
        %v1240 = vmax.f32 %v1238, 0.0
        %v1241 = vld [vmem:[#allocation2] sm:$0xff]
        %v1242 = vld [vmem:[#allocation2 + $0x8] sm:$0xff]
        %v1243 = vadd.f32 %v1241, %v1239
        %v1244 = vadd.f32 %v1242, %v1240
        %s1245 = smul.u32 %s115, 32
        %s1246 = scalar_lea.vmem [#allocation9], %s1245
        %v1247 = vld [vmem:[%s1246] sm:$0xff]
        %v1248 = vld [vmem:[%s1246 + $0x8] sm:$0xff]
        %v1249 = vld [vmem:[%s1246 + $0x10] sm:$0xff]
        %v1250 = vld [vmem:[%s1246 + $0x18] sm:$0xff]
        %s1251 = scalar_lea.vmem %s9, %s115
        %v1252 = vld [vmem:[%s1251] sm:$0x1]
        %v1254 = vlaneseq
        %v1255 = vshrl.u32 %v1254, 7
        %v1256 = vsub.s32 0, %v1255
        %v1257 = vrot.slane %v1252, %v1256
        %v1260 = vsel %vm94, %v1243, 0
        %v1263 = vsel %vm94, %v1244, 0
        %1265 = vmatprep.subr.mxu0 0.0
        %1266 = vmatpush1.msra.mxu0 %v1247
        %1267 = vmatprep.subr.mxu0 0.0
        %1268 = vmatpush1.msra.mxu0 %v1248
        %1269 = vmatprep.subr.mxu0 0.0
        %1270 = vmatpush1.msra.mxu0 %v1249
        %1271 = vmatprep.subr.mxu0 0.0
        %1272 = vmatpush1.msra.mxu0 %v1250
        %1273 = vmatprep.subr.mxu0 0.0
        %1274 = vmatpush1.msra.mxu0 0.0
        %1275 = vmatprep.subr.mxu0 0.0
        %1276 = vmatpush1.msra.mxu0 0.0
        %1277 = vmatprep.subr.mxu0 0.0
        %1278 = vmatpush1.msra.mxu0 0.0
        %1279 = vmatprep.subr.mxu0 0.0
        %1280 = vmatpush1.msra.mxu0 0.0
        %1281 = vmatprep.subr.mxu0 0.0
        %1282 = vmatpush1.msra.mxu0 0.0
        %1283 = vmatprep.subr.mxu0 0.0
        %1284 = vmatpush1.msra.mxu0 0.0
        %1285 = vmatprep.subr.mxu0 0.0
        %1286 = vmatpush1.msra.mxu0 0.0
        %1287 = vmatprep.subr.mxu0 0.0
        %1288 = vmatpush1.msra.mxu0 0.0
        %1289 = vmatprep.subr.mxu0 0.0
        %1290 = vmatpush1.msra.mxu0 0.0
        %1291 = vmatprep.subr.mxu0 0.0
        %1292 = vmatpush1.msra.mxu0 0.0
        %1293 = vmatprep.subr.mxu0 0.0
        %1294 = vmatpush1.msra.mxu0 0.0
        %1295 = vmatprep.subr.mxu0 0.0
        %1296 = vmatpush1.msra.mxu0 0.0
        %1297 = vmatprep.subr.mxu0 0.0
        %1298 = vmatpush1.msra.mxu0 0.0
        %1299 = vmatprep.subr.mxu0 0.0
        %1300 = vmatpush1.msra.mxu0 0.0
        %1301 = vmatprep.subr.mxu0 0.0
        %1302 = vmatpush1.msra.mxu0 0.0
        %1303 = vmatprep.subr.mxu0 0.0
        %1304 = vmatpush1.msra.mxu0 0.0
        %1305 = vmatprep.subr.mxu0 0.0
        %1306 = vmatpush1.msra.mxu0 0.0
        %1307 = vmatprep.subr.mxu0 0.0
        %1308 = vmatpush1.msra.mxu0 0.0
        %1309 = vmatprep.subr.mxu0 0.0
        %1310 = vmatpush1.msra.mxu0 0.0
        %1311 = vmatprep.subr.mxu0 0.0
        %1312 = vmatpush1.msra.mxu0 0.0
        %1313 = vmatprep.subr.mxu0 0.0
        %1314 = vmatpush1.msra.mxu0 0.0
        %1315 = vmatprep.subr.mxu0 0.0
        %1316 = vmatpush1.msra.mxu0 0.0
        %1317 = vmatprep.subr.mxu0 0.0
        %1318 = vmatpush1.msra.mxu0 0.0
        %1319 = vmatprep.subr.mxu0 0.0
        %1320 = vmatpush1.msra.mxu0 0.0
        %1321 = vmatprep.subr.mxu0 0.0
        %1322 = vmatpush1.msra.mxu0 0.0
        %1323 = vmatprep.subr.mxu0 0.0
        %1324 = vmatpush1.msra.mxu0 0.0
        %1325 = vmatprep.subr.mxu0 0.0
        %1326 = vmatpush1.msra.mxu0 0.0
        %1327 = vmatprep.subr.mxu0 0.0
        %1328 = vmatpush1.msra.mxu0 0.0
        %1329 = vmatprep.mubr.f32.mxu0 0.0
        %1330 = vmatmul.mubr.f32.gmra.mrb[0].mxu0 %v1260
        %v1331 = vpop.f32.mrb[0].mxu0
        %v1332 = vadd.f32 %v1257, %v1331
        %v1333 = vpop.f32.mrb[0].mxu0
        %1334 = vmatprep.mubr.f32.mxu0 0.0
        %1335 = vmatmul.mubr.f32.gmra.mrb[0].mxu0 %v1263
        %v1336 = vpop.f32.mrb[0].mxu0
        %v1337 = vadd.f32 %v1257, %v1336
        %v1338 = vpop.f32.mrb[0].mxu0
        %1339 = vdwg.mxu0
        %1340 = vst.msk [vmem:[#allocation4] sm:$0xff] %vm94, %v1332
        %1341 = vst.msk [vmem:[#allocation4 + $0x8] sm:$0xff] %vm94, %v1337
      $region64: #{hla64_forward.1} parent=57 // pred_fallthru
        _
      %s1342 = scalar_select %p1233, 1, 0
      %s1343 = sand.u32 %s110, 3
      %p1344 = scmp.eq.s32.totalorder %s1343, 3
      %s1345 = sadd.s32 %s115, 1
      // Predicated region
      $region65: #{hla64_forward.1} parent=57 // pred_check
        %p1346 = pneg %p1344
      $region66: #{hla64_forward.1} parent=57 // pred_check_branch
        %1348 = sbr.rel (%p1346) target = $region68
      $region67: #{hla64_forward.1} parent=57 // pred_region
        %v1349 = vld [vmem:[#allocation4] sm:$0xff]
        %v1350 = vld [vmem:[#allocation4 + $0x8] sm:$0xff]
        %v1351 = vmax.f32 %v1349, 0.0
        %v1352 = vmax.f32 %v1350, 0.0
        %s1353 = scalar_lea.vmem [#allocation2], 16
        %v1354 = vld [vmem:[%s1353] sm:$0xff]
        %v1355 = vld [vmem:[%s1353 + $0x8] sm:$0xff]
        %v1356 = vadd.f32 %v1354, %v1351
        %v1357 = vadd.f32 %v1355, %v1352
        %s1358 = smul.u32 %s1345, 32
        %s1359 = scalar_lea.vmem [#allocation9], %s1358
        %v1360 = vld [vmem:[%s1359] sm:$0xff]
        %v1361 = vld [vmem:[%s1359 + $0x8] sm:$0xff]
        %v1362 = vld [vmem:[%s1359 + $0x10] sm:$0xff]
        %v1363 = vld [vmem:[%s1359 + $0x18] sm:$0xff]
        %s1364 = scalar_lea.vmem %s9, %s1345
        %v1365 = vld [vmem:[%s1364] sm:$0x1]
        %v1367 = vlaneseq
        %v1368 = vshrl.u32 %v1367, 7
        %v1369 = vsub.s32 0, %v1368
        %v1370 = vrot.slane %v1365, %v1369
        %v1373 = vsel %vm94, %v1356, 0
        %v1376 = vsel %vm94, %v1357, 0
        %1378 = vmatprep.subr.mxu0 0.0
        %1379 = vmatpush1.msra.mxu0 %v1360
        %1380 = vmatprep.subr.mxu0 0.0
        %1381 = vmatpush1.msra.mxu0 %v1361
        %1382 = vmatprep.subr.mxu0 0.0
        %1383 = vmatpush1.msra.mxu0 %v1362
        %1384 = vmatprep.subr.mxu0 0.0
        %1385 = vmatpush1.msra.mxu0 %v1363
        %1386 = vmatprep.subr.mxu0 0.0
        %1387 = vmatpush1.msra.mxu0 0.0
        %1388 = vmatprep.subr.mxu0 0.0
        %1389 = vmatpush1.msra.mxu0 0.0
        %1390 = vmatprep.subr.mxu0 0.0
        %1391 = vmatpush1.msra.mxu0 0.0
        %1392 = vmatprep.subr.mxu0 0.0
        %1393 = vmatpush1.msra.mxu0 0.0
        %1394 = vmatprep.subr.mxu0 0.0
        %1395 = vmatpush1.msra.mxu0 0.0
        %1396 = vmatprep.subr.mxu0 0.0
        %1397 = vmatpush1.msra.mxu0 0.0
        %1398 = vmatprep.subr.mxu0 0.0
        %1399 = vmatpush1.msra.mxu0 0.0
        %1400 = vmatprep.subr.mxu0 0.0
        %1401 = vmatpush1.msra.mxu0 0.0
        %1402 = vmatprep.subr.mxu0 0.0
        %1403 = vmatpush1.msra.mxu0 0.0
        %1404 = vmatprep.subr.mxu0 0.0
        %1405 = vmatpush1.msra.mxu0 0.0
        %1406 = vmatprep.subr.mxu0 0.0
        %1407 = vmatpush1.msra.mxu0 0.0
        %1408 = vmatprep.subr.mxu0 0.0
        %1409 = vmatpush1.msra.mxu0 0.0
        %1410 = vmatprep.subr.mxu0 0.0
        %1411 = vmatpush1.msra.mxu0 0.0
        %1412 = vmatprep.subr.mxu0 0.0
        %1413 = vmatpush1.msra.mxu0 0.0
        %1414 = vmatprep.subr.mxu0 0.0
        %1415 = vmatpush1.msra.mxu0 0.0
        %1416 = vmatprep.subr.mxu0 0.0
        %1417 = vmatpush1.msra.mxu0 0.0
        %1418 = vmatprep.subr.mxu0 0.0
        %1419 = vmatpush1.msra.mxu0 0.0
        %1420 = vmatprep.subr.mxu0 0.0
        %1421 = vmatpush1.msra.mxu0 0.0
        %1422 = vmatprep.subr.mxu0 0.0
        %1423 = vmatpush1.msra.mxu0 0.0
        %1424 = vmatprep.subr.mxu0 0.0
        %1425 = vmatpush1.msra.mxu0 0.0
        %1426 = vmatprep.subr.mxu0 0.0
        %1427 = vmatpush1.msra.mxu0 0.0
        %1428 = vmatprep.subr.mxu0 0.0
        %1429 = vmatpush1.msra.mxu0 0.0
        %1430 = vmatprep.subr.mxu0 0.0
        %1431 = vmatpush1.msra.mxu0 0.0
        %1432 = vmatprep.subr.mxu0 0.0
        %1433 = vmatpush1.msra.mxu0 0.0
        %1434 = vmatprep.subr.mxu0 0.0
        %1435 = vmatpush1.msra.mxu0 0.0
        %1436 = vmatprep.subr.mxu0 0.0
        %1437 = vmatpush1.msra.mxu0 0.0
        %1438 = vmatprep.subr.mxu0 0.0
        %1439 = vmatpush1.msra.mxu0 0.0
        %1440 = vmatprep.subr.mxu0 0.0
        %1441 = vmatpush1.msra.mxu0 0.0
        %1442 = vmatprep.mubr.f32.mxu0 0.0
        %1443 = vmatmul.mubr.f32.gmra.mrb[0].mxu0 %v1373
        %v1444 = vpop.f32.mrb[0].mxu0
        %v1445 = vadd.f32 %v1370, %v1444
        %v1446 = vpop.f32.mrb[0].mxu0
        %1447 = vmatprep.mubr.f32.mxu0 0.0
        %1448 = vmatmul.mubr.f32.gmra.mrb[0].mxu0 %v1376
        %v1449 = vpop.f32.mrb[0].mxu0
        %v1450 = vadd.f32 %v1370, %v1449
        %v1451 = vpop.f32.mrb[0].mxu0
        %1452 = vdwg.mxu0
        %1453 = vst.msk [vmem:[#allocation4] sm:$0xff] %vm94, %v1445
        %1454 = vst.msk [vmem:[#allocation4 + $0x8] sm:$0xff] %vm94, %v1450
      $region68: #{hla64_forward.1} parent=57 // pred_fallthru
        _
      %s1455 = scalar_select %p1344, 1, 0
      %s1456 = sadd.s32 %s1342, %s1455
      %s1457 = sand.u32 %s110, 7
      %p1458 = scmp.eq.s32.totalorder %s1457, 7
      %s1459 = sadd.s32 %s115, 2
      // Predicated region
      $region69: #{hla64_forward.1} parent=57 // pred_check
        %p1460 = pneg %p1458
      $region70: #{hla64_forward.1} parent=57 // pred_check_branch
        %1462 = sbr.rel (%p1460) target = $region72
      $region71: #{hla64_forward.1} parent=57 // pred_region
        %v1463 = vld [vmem:[#allocation4] sm:$0xff]
        %v1464 = vld [vmem:[#allocation4 + $0x8] sm:$0xff]
        %v1465 = vmax.f32 %v1463, 0.0
        %v1466 = vmax.f32 %v1464, 0.0
        %s1467 = scalar_lea.vmem [#allocation2], 32
        %v1468 = vld [vmem:[%s1467] sm:$0xff]
        %v1469 = vld [vmem:[%s1467 + $0x8] sm:$0xff]
        %v1470 = vadd.f32 %v1468, %v1465
        %v1471 = vadd.f32 %v1469, %v1466
        %s1472 = smul.u32 %s1459, 32
        %s1473 = scalar_lea.vmem [#allocation9], %s1472
        %v1474 = vld [vmem:[%s1473] sm:$0xff]
        %v1475 = vld [vmem:[%s1473 + $0x8] sm:$0xff]
        %v1476 = vld [vmem:[%s1473 + $0x10] sm:$0xff]
        %v1477 = vld [vmem:[%s1473 + $0x18] sm:$0xff]
        %s1478 = scalar_lea.vmem %s9, %s1459
        %v1479 = vld [vmem:[%s1478] sm:$0x1]
        %v1481 = vlaneseq
        %v1482 = vshrl.u32 %v1481, 7
        %v1483 = vsub.s32 0, %v1482
        %v1484 = vrot.slane %v1479, %v1483
        %v1487 = vsel %vm94, %v1470, 0
        %v1490 = vsel %vm94, %v1471, 0
        %1492 = vmatprep.subr.mxu0 0.0
        %1493 = vmatpush1.msra.mxu0 %v1474
        %1494 = vmatprep.subr.mxu0 0.0
        %1495 = vmatpush1.msra.mxu0 %v1475
        %1496 = vmatprep.subr.mxu0 0.0
        %1497 = vmatpush1.msra.mxu0 %v1476
        %1498 = vmatprep.subr.mxu0 0.0
        %1499 = vmatpush1.msra.mxu0 %v1477
        %1500 = vmatprep.subr.mxu0 0.0
        %1501 = vmatpush1.msra.mxu0 0.0
        %1502 = vmatprep.subr.mxu0 0.0
        %1503 = vmatpush1.msra.mxu0 0.0
        %1504 = vmatprep.subr.mxu0 0.0
        %1505 = vmatpush1.msra.mxu0 0.0
        %1506 = vmatprep.subr.mxu0 0.0
        %1507 = vmatpush1.msra.mxu0 0.0
        %1508 = vmatprep.subr.mxu0 0.0
        %1509 = vmatpush1.msra.mxu0 0.0
        %1510 = vmatprep.subr.mxu0 0.0
        %1511 = vmatpush1.msra.mxu0 0.0
        %1512 = vmatprep.subr.mxu0 0.0
        %1513 = vmatpush1.msra.mxu0 0.0
        %1514 = vmatprep.subr.mxu0 0.0
        %1515 = vmatpush1.msra.mxu0 0.0
        %1516 = vmatprep.subr.mxu0 0.0
        %1517 = vmatpush1.msra.mxu0 0.0
        %1518 = vmatprep.subr.mxu0 0.0
        %1519 = vmatpush1.msra.mxu0 0.0
        %1520 = vmatprep.subr.mxu0 0.0
        %1521 = vmatpush1.msra.mxu0 0.0
        %1522 = vmatprep.subr.mxu0 0.0
        %1523 = vmatpush1.msra.mxu0 0.0
        %1524 = vmatprep.subr.mxu0 0.0
        %1525 = vmatpush1.msra.mxu0 0.0
        %1526 = vmatprep.subr.mxu0 0.0
        %1527 = vmatpush1.msra.mxu0 0.0
        %1528 = vmatprep.subr.mxu0 0.0
        %1529 = vmatpush1.msra.mxu0 0.0
        %1530 = vmatprep.subr.mxu0 0.0
        %1531 = vmatpush1.msra.mxu0 0.0
        %1532 = vmatprep.subr.mxu0 0.0
        %1533 = vmatpush1.msra.mxu0 0.0
        %1534 = vmatprep.subr.mxu0 0.0
        %1535 = vmatpush1.msra.mxu0 0.0
        %1536 = vmatprep.subr.mxu0 0.0
        %1537 = vmatpush1.msra.mxu0 0.0
        %1538 = vmatprep.subr.mxu0 0.0
        %1539 = vmatpush1.msra.mxu0 0.0
        %1540 = vmatprep.subr.mxu0 0.0
        %1541 = vmatpush1.msra.mxu0 0.0
        %1542 = vmatprep.subr.mxu0 0.0
        %1543 = vmatpush1.msra.mxu0 0.0
        %1544 = vmatprep.subr.mxu0 0.0
        %1545 = vmatpush1.msra.mxu0 0.0
        %1546 = vmatprep.subr.mxu0 0.0
        %1547 = vmatpush1.msra.mxu0 0.0
        %1548 = vmatprep.subr.mxu0 0.0
        %1549 = vmatpush1.msra.mxu0 0.0
        %1550 = vmatprep.subr.mxu0 0.0
        %1551 = vmatpush1.msra.mxu0 0.0
        %1552 = vmatprep.subr.mxu0 0.0
        %1553 = vmatpush1.msra.mxu0 0.0
        %1554 = vmatprep.subr.mxu0 0.0
        %1555 = vmatpush1.msra.mxu0 0.0
        %1556 = vmatprep.mubr.f32.mxu0 0.0
        %1557 = vmatmul.mubr.f32.gmra.mrb[0].mxu0 %v1487
        %v1558 = vpop.f32.mrb[0].mxu0
        %v1559 = vadd.f32 %v1484, %v1558
        %v1560 = vpop.f32.mrb[0].mxu0
        %1561 = vmatprep.mubr.f32.mxu0 0.0
        %1562 = vmatmul.mubr.f32.gmra.mrb[0].mxu0 %v1490
        %v1563 = vpop.f32.mrb[0].mxu0
        %v1564 = vadd.f32 %v1484, %v1563
        %v1565 = vpop.f32.mrb[0].mxu0
        %1566 = vdwg.mxu0
        %1567 = vst.msk [vmem:[#allocation4] sm:$0xff] %vm94, %v1559
        %1568 = vst.msk [vmem:[#allocation4 + $0x8] sm:$0xff] %vm94, %v1564
      $region72: #{hla64_forward.1} parent=57 // pred_fallthru
        _
      %s1569 = scalar_select %p1458, 1, 0
      %s1570 = sadd.s32 %s1456, %s1569
      %s1571 = sand.u32 %s110, 15
      %p1572 = scmp.eq.s32.totalorder %s1571, 15
      %s1573 = sadd.s32 %s115, 3
      // Predicated region
      $region73: #{hla64_forward.1} parent=57 // pred_check
        %p1574 = pneg %p1572
      $region74: #{hla64_forward.1} parent=57 // pred_check_branch
        %1576 = sbr.rel (%p1574) target = $region76
      $region75: #{hla64_forward.1} parent=57 // pred_region
        %v1577 = vld [vmem:[#allocation4] sm:$0xff]
        %v1578 = vld [vmem:[#allocation4 + $0x8] sm:$0xff]
        %v1579 = vmax.f32 %v1577, 0.0
        %v1580 = vmax.f32 %v1578, 0.0
        %s1581 = scalar_lea.vmem [#allocation2], 48
        %v1582 = vld [vmem:[%s1581] sm:$0xff]
        %v1583 = vld [vmem:[%s1581 + $0x8] sm:$0xff]
        %v1584 = vadd.f32 %v1582, %v1579
        %v1585 = vadd.f32 %v1583, %v1580
        %s1586 = smul.u32 %s1573, 32
        %s1587 = scalar_lea.vmem [#allocation9], %s1586
        %v1588 = vld [vmem:[%s1587] sm:$0xff]
        %v1589 = vld [vmem:[%s1587 + $0x8] sm:$0xff]
        %v1590 = vld [vmem:[%s1587 + $0x10] sm:$0xff]
        %v1591 = vld [vmem:[%s1587 + $0x18] sm:$0xff]
        %s1592 = scalar_lea.vmem %s9, %s1573
        %v1593 = vld [vmem:[%s1592] sm:$0x1]
        %v1595 = vlaneseq
        %v1596 = vshrl.u32 %v1595, 7
        %v1597 = vsub.s32 0, %v1596
        %v1598 = vrot.slane %v1593, %v1597
        %v1601 = vsel %vm94, %v1584, 0
        %v1604 = vsel %vm94, %v1585, 0
        %1606 = vmatprep.subr.mxu0 0.0
        %1607 = vmatpush1.msra.mxu0 %v1588
        %1608 = vmatprep.subr.mxu0 0.0
        %1609 = vmatpush1.msra.mxu0 %v1589
        %1610 = vmatprep.subr.mxu0 0.0
        %1611 = vmatpush1.msra.mxu0 %v1590
        %1612 = vmatprep.subr.mxu0 0.0
        %1613 = vmatpush1.msra.mxu0 %v1591
        %1614 = vmatprep.subr.mxu0 0.0
        %1615 = vmatpush1.msra.mxu0 0.0
        %1616 = vmatprep.subr.mxu0 0.0
        %1617 = vmatpush1.msra.mxu0 0.0
        %1618 = vmatprep.subr.mxu0 0.0
        %1619 = vmatpush1.msra.mxu0 0.0
        %1620 = vmatprep.subr.mxu0 0.0
        %1621 = vmatpush1.msra.mxu0 0.0
        %1622 = vmatprep.subr.mxu0 0.0
        %1623 = vmatpush1.msra.mxu0 0.0
        %1624 = vmatprep.subr.mxu0 0.0
        %1625 = vmatpush1.msra.mxu0 0.0
        %1626 = vmatprep.subr.mxu0 0.0
        %1627 = vmatpush1.msra.mxu0 0.0
        %1628 = vmatprep.subr.mxu0 0.0
        %1629 = vmatpush1.msra.mxu0 0.0
        %1630 = vmatprep.subr.mxu0 0.0
        %1631 = vmatpush1.msra.mxu0 0.0
        %1632 = vmatprep.subr.mxu0 0.0
        %1633 = vmatpush1.msra.mxu0 0.0
        %1634 = vmatprep.subr.mxu0 0.0
        %1635 = vmatpush1.msra.mxu0 0.0
        %1636 = vmatprep.subr.mxu0 0.0
        %1637 = vmatpush1.msra.mxu0 0.0
        %1638 = vmatprep.subr.mxu0 0.0
        %1639 = vmatpush1.msra.mxu0 0.0
        %1640 = vmatprep.subr.mxu0 0.0
        %1641 = vmatpush1.msra.mxu0 0.0
        %1642 = vmatprep.subr.mxu0 0.0
        %1643 = vmatpush1.msra.mxu0 0.0
        %1644 = vmatprep.subr.mxu0 0.0
        %1645 = vmatpush1.msra.mxu0 0.0
        %1646 = vmatprep.subr.mxu0 0.0
        %1647 = vmatpush1.msra.mxu0 0.0
        %1648 = vmatprep.subr.mxu0 0.0
        %1649 = vmatpush1.msra.mxu0 0.0
        %1650 = vmatprep.subr.mxu0 0.0
        %1651 = vmatpush1.msra.mxu0 0.0
        %1652 = vmatprep.subr.mxu0 0.0
        %1653 = vmatpush1.msra.mxu0 0.0
        %1654 = vmatprep.subr.mxu0 0.0
        %1655 = vmatpush1.msra.mxu0 0.0
        %1656 = vmatprep.subr.mxu0 0.0
        %1657 = vmatpush1.msra.mxu0 0.0
        %1658 = vmatprep.subr.mxu0 0.0
        %1659 = vmatpush1.msra.mxu0 0.0
        %1660 = vmatprep.subr.mxu0 0.0
        %1661 = vmatpush1.msra.mxu0 0.0
        %1662 = vmatprep.subr.mxu0 0.0
        %1663 = vmatpush1.msra.mxu0 0.0
        %1664 = vmatprep.subr.mxu0 0.0
        %1665 = vmatpush1.msra.mxu0 0.0
        %1666 = vmatprep.subr.mxu0 0.0
        %1667 = vmatpush1.msra.mxu0 0.0
        %1668 = vmatprep.subr.mxu0 0.0
        %1669 = vmatpush1.msra.mxu0 0.0
        %1670 = vmatprep.mubr.f32.mxu0 0.0
        %1671 = vmatmul.mubr.f32.gmra.mrb[0].mxu0 %v1601
        %v1672 = vpop.f32.mrb[0].mxu0
        %v1673 = vadd.f32 %v1598, %v1672
        %v1674 = vpop.f32.mrb[0].mxu0
        %1675 = vmatprep.mubr.f32.mxu0 0.0
        %1676 = vmatmul.mubr.f32.gmra.mrb[0].mxu0 %v1604
        %v1677 = vpop.f32.mrb[0].mxu0
        %v1678 = vadd.f32 %v1598, %v1677
        %v1679 = vpop.f32.mrb[0].mxu0
        %1680 = vdwg.mxu0
        %1681 = vst.msk [vmem:[#allocation4] sm:$0xff] %vm94, %v1673
        %1682 = vst.msk [vmem:[#allocation4 + $0x8] sm:$0xff] %vm94, %v1678
      $region76: #{hla64_forward.1} parent=57 // pred_fallthru
        _
      %s1683 = scalar_select %p1572, 1, 0
      %s1684 = sadd.s32 %s1570, %s1683
      %s1685 = sand.u32 %s110, 31
      %p1686 = scmp.eq.s32.totalorder %s1685, 31
      %s1687 = sadd.s32 %s115, 4
      // Predicated region
      $region77: #{hla64_forward.1} parent=57 // pred_check
        %p1688 = pneg %p1686
      $region78: #{hla64_forward.1} parent=57 // pred_check_branch
        %1690 = sbr.rel (%p1688) target = $region80
      $region79: #{hla64_forward.1} parent=57 // pred_region
        %v1691 = vld [vmem:[#allocation4] sm:$0xff]
        %v1692 = vld [vmem:[#allocation4 + $0x8] sm:$0xff]
        %v1693 = vmax.f32 %v1691, 0.0
        %v1694 = vmax.f32 %v1692, 0.0
        %s1695 = scalar_lea.vmem [#allocation2], 64
        %v1696 = vld [vmem:[%s1695] sm:$0xff]
        %v1697 = vld [vmem:[%s1695 + $0x8] sm:$0xff]
        %v1698 = vadd.f32 %v1696, %v1693
        %v1699 = vadd.f32 %v1697, %v1694
        %s1700 = smul.u32 %s1687, 32
        %s1701 = scalar_lea.vmem [#allocation9], %s1700
        %v1702 = vld [vmem:[%s1701] sm:$0xff]
        %v1703 = vld [vmem:[%s1701 + $0x8] sm:$0xff]
        %v1704 = vld [vmem:[%s1701 + $0x10] sm:$0xff]
        %v1705 = vld [vmem:[%s1701 + $0x18] sm:$0xff]
        %s1706 = scalar_lea.vmem %s9, %s1687
        %v1707 = vld [vmem:[%s1706] sm:$0x1]
        %v1709 = vlaneseq
        %v1710 = vshrl.u32 %v1709, 7
        %v1711 = vsub.s32 0, %v1710
        %v1712 = vrot.slane %v1707, %v1711
        %v1715 = vsel %vm94, %v1698, 0
        %v1718 = vsel %vm94, %v1699, 0
        %1720 = vmatprep.subr.mxu0 0.0
        %1721 = vmatpush1.msra.mxu0 %v1702
        %1722 = vmatprep.subr.mxu0 0.0
        %1723 = vmatpush1.msra.mxu0 %v1703
        %1724 = vmatprep.subr.mxu0 0.0
        %1725 = vmatpush1.msra.mxu0 %v1704
        %1726 = vmatprep.subr.mxu0 0.0
        %1727 = vmatpush1.msra.mxu0 %v1705
        %1728 = vmatprep.subr.mxu0 0.0
        %1729 = vmatpush1.msra.mxu0 0.0
        %1730 = vmatprep.subr.mxu0 0.0
        %1731 = vmatpush1.msra.mxu0 0.0
        %1732 = vmatprep.subr.mxu0 0.0
        %1733 = vmatpush1.msra.mxu0 0.0
        %1734 = vmatprep.subr.mxu0 0.0
        %1735 = vmatpush1.msra.mxu0 0.0
        %1736 = vmatprep.subr.mxu0 0.0
        %1737 = vmatpush1.msra.mxu0 0.0
        %1738 = vmatprep.subr.mxu0 0.0
        %1739 = vmatpush1.msra.mxu0 0.0
        %1740 = vmatprep.subr.mxu0 0.0
        %1741 = vmatpush1.msra.mxu0 0.0
        %1742 = vmatprep.subr.mxu0 0.0
        %1743 = vmatpush1.msra.mxu0 0.0
        %1744 = vmatprep.subr.mxu0 0.0
        %1745 = vmatpush1.msra.mxu0 0.0
        %1746 = vmatprep.subr.mxu0 0.0
        %1747 = vmatpush1.msra.mxu0 0.0
        %1748 = vmatprep.subr.mxu0 0.0
        %1749 = vmatpush1.msra.mxu0 0.0
        %1750 = vmatprep.subr.mxu0 0.0
        %1751 = vmatpush1.msra.mxu0 0.0
        %1752 = vmatprep.subr.mxu0 0.0
        %1753 = vmatpush1.msra.mxu0 0.0
        %1754 = vmatprep.subr.mxu0 0.0
        %1755 = vmatpush1.msra.mxu0 0.0
        %1756 = vmatprep.subr.mxu0 0.0
        %1757 = vmatpush1.msra.mxu0 0.0
        %1758 = vmatprep.subr.mxu0 0.0
        %1759 = vmatpush1.msra.mxu0 0.0
        %1760 = vmatprep.subr.mxu0 0.0
        %1761 = vmatpush1.msra.mxu0 0.0
        %1762 = vmatprep.subr.mxu0 0.0
        %1763 = vmatpush1.msra.mxu0 0.0
        %1764 = vmatprep.subr.mxu0 0.0
        %1765 = vmatpush1.msra.mxu0 0.0
        %1766 = vmatprep.subr.mxu0 0.0
        %1767 = vmatpush1.msra.mxu0 0.0
        %1768 = vmatprep.subr.mxu0 0.0
        %1769 = vmatpush1.msra.mxu0 0.0
        %1770 = vmatprep.subr.mxu0 0.0
        %1771 = vmatpush1.msra.mxu0 0.0
        %1772 = vmatprep.subr.mxu0 0.0
        %1773 = vmatpush1.msra.mxu0 0.0
        %1774 = vmatprep.subr.mxu0 0.0
        %1775 = vmatpush1.msra.mxu0 0.0
        %1776 = vmatprep.subr.mxu0 0.0
        %1777 = vmatpush1.msra.mxu0 0.0
        %1778 = vmatprep.subr.mxu0 0.0
        %1779 = vmatpush1.msra.mxu0 0.0
        %1780 = vmatprep.subr.mxu0 0.0
        %1781 = vmatpush1.msra.mxu0 0.0
        %1782 = vmatprep.subr.mxu0 0.0
        %1783 = vmatpush1.msra.mxu0 0.0
        %1784 = vmatprep.mubr.f32.mxu0 0.0
        %1785 = vmatmul.mubr.f32.gmra.mrb[0].mxu0 %v1715
        %v1786 = vpop.f32.mrb[0].mxu0
        %v1787 = vadd.f32 %v1712, %v1786
        %v1788 = vpop.f32.mrb[0].mxu0
        %1789 = vmatprep.mubr.f32.mxu0 0.0
        %1790 = vmatmul.mubr.f32.gmra.mrb[0].mxu0 %v1718
        %v1791 = vpop.f32.mrb[0].mxu0
        %v1792 = vadd.f32 %v1712, %v1791
        %v1793 = vpop.f32.mrb[0].mxu0
        %1794 = vdwg.mxu0
        %1795 = vst.msk [vmem:[#allocation4] sm:$0xff] %vm94, %v1787
        %1796 = vst.msk [vmem:[#allocation4 + $0x8] sm:$0xff] %vm94, %v1792
      $region80: #{hla64_forward.1} parent=57 // pred_fallthru
        _
      %s1797 = scalar_select %p1686, 1, 0
      %s1798 = sadd.s32 %s1684, %s1797
      %v1799 = vld [vmem:[#allocation4] sm:$0xff]
      %v1800 = vld [vmem:[#allocation4 + $0x8] sm:$0xff]
      %v1801 = vmax.f32 %v1799, 0.0
      %v1802 = vmax.f32 %v1800, 0.0
      %s1803 = smul.u32 %s1798, 16
      %s1804 = scalar_lea.vmem [#allocation2], %s1803
      %1805 = vst.msk [vmem:[%s1804] sm:$0xff] %vm94, %v1801
      %1806 = vst.msk [vmem:[%s1804 + $0x8] sm:$0xff] %vm94, %v1802
      %1807 = vst.msk [vmem:[#allocation3] sm:$0xff] %vm94, %v1801
      %1808 = vst.msk [vmem:[#allocation3 + $0x8] sm:$0xff] %vm94, %v1802
      %p1809 = scmp.eq.s32.totalorder %s110, 31
      // Predicated region
      $region81: #{hla64_forward.1} parent=57 // pred_check
        %p1810 = pneg %p1809
      $region82: #{hla64_forward.1} parent=57 // pred_check_branch
        %1812 = sbr.rel (%p1810) target = $region84
      $region83: #{hla64_forward.1} parent=57 // pred_region
        %1813 = vst.msk [vmem:[%s10] sm:$0xff] %vm94, %v1799
        %1814 = vst.msk [vmem:[%s10 + $0x8] sm:$0xff] %vm94, %v1800
      $region84: #{hla64_forward.1} parent=57 // pred_fallthru
        _
      %s1815 = sadd.s32 %s115, %s1798
    $region58: #{hla64_forward.1} parent=1 // loop_footer
      %s114 = sadd.s32 1, %s110
    $region59: #{hla64_forward.1} parent=1 // loop_footer_branch
      %109 = sbr.rel target = $region55
    $region60: #{hla64_forward.1} parent=1 // loop_exit
      _
    // Predicated region
    $region85: #{hla64_forward.1} parent=1 // pred_check
      _
    $region86: #{hla64_forward.1} parent=1 // pred_check_branch
      %1817 = sbr.rel (0) target = $region88
    $region87: #{hla64_forward.1} parent=1 // pred_region
      _
    $region88: #{hla64_forward.1} parent=1 // pred_fallthru
      _
    // Predicated region
    $region89: #{hla64_forward.1} parent=1 // pred_check
      _
    $region90: #{hla64_forward.1} parent=1 // pred_check_branch
      %1819 = sbr.rel (0) target = $region92
    $region91: #{hla64_forward.1} parent=1 // pred_region
      _
    $region92: #{hla64_forward.1} parent=1 // pred_fallthru
      _
    %1820 = vsyncpa [#allocation6], 1
    %1821 = vsyncpa [#allocation8], 1

</llo_original>
